<compile_context>
chip_gen: v7x
topology: tpu7x:2x2x1
jax: 0.10.0
libtpu: 0.0.40
codegen_flags: <defaults>
</compile_context>

<pallas_src>
import jax
import jax.numpy as jnp
from jax.experimental import pallas as pl
from jax.experimental.pallas import tpu as pltpu

# --------------------------- configuration (mirrors args) ---------------------------
EMBEDDING_DIM = 32            # args.embedding_dim
EMB_DIM1      = 4             # args.embedding_shape1
EMB_DIM2      = EMBEDDING_DIM // EMB_DIM1   # 8
H_IN          = 3 * EMB_DIM1  # stacked height = 12
W_IN          = EMB_DIM2      # 8
H_OUT         = H_IN - 2      # 10  (3x3 conv, no padding)
W_OUT         = W_IN - 2      # 6
N_FILT        = 32
HIDDEN_SIZE   = N_FILT * H_OUT * W_OUT      # args.hidden_size = 1920  (15 * 128 lanes)
STACK_DIM     = 3 * EMBEDDING_DIM           # 96
OUTPUT_DIM    = 64            # = num_entities of the inner TConvE
OUT_PAD       = 128           # lane-padded logits/softmax width
BATCH         = 2
EPS           = 1e-5
NEG_PAD       = -1e30         # additive mask for padded vocabulary columns


# ------------------------------- fused Pallas kernel --------------------------------
def fused_kernel(x_ref, mask_ref, wconv_ref, bconv_ref, fcw_ref, fcb_ref,
                 embT_ref, bent_ref, o_ref):
    # Unrolled conv (bn0 + conv bias + bn1 + NCHW flatten folded offline):
    # single K=96 MXU dot, bf16 operands, f32 accumulation.
    h = jnp.dot(x_ref[...].astype(jnp.bfloat16), wconv_ref[...],
                preferred_element_type=jnp.float32) + bconv_ref[...]
    h = jnp.maximum(h, 0.0)                                            # relu (post-bn1)

    # fc (+bn2 folded) + relu
    h2 = jnp.dot(h.astype(jnp.bfloat16), fcw_ref[...],
                 preferred_element_type=jnp.float32) + fcb_ref[...]
    h2 = jnp.maximum(h2, 0.0)

    # logits against emb_e^T (lane-padded to 128), + b
    logits = jnp.dot(h2.astype(jnp.bfloat16), embT_ref[...],
                     preferred_element_type=jnp.float32) + bent_ref[...]
    pred = 1.0 / (1.0 + jnp.exp(-logits))          # exact sigmoid (f32)

    # copy-vocabulary additive mask (precomputed in wrapper) + softmax(dim=1)
    score = pred + mask_ref[...]
    m = jnp.max(score, axis=-1, keepdims=True)
    e = jnp.exp(score - m)                          # padded cols: exp(-1e30) == 0 exactly
    o_ref[...] = e / jnp.sum(e, axis=-1, keepdims=True)   # exact normalization


# --------------------------------- pallas_call glue ---------------------------------
def _round_up(x, m):
    return (x + m - 1) // m * m


def recent_history_forward(kp, s_embed, rel_embed, o_embed, time_embed,
                           copy_vocabulary, entity):
    if entity == 'object':
        e1, rel = s_embed, rel_embed[0]
    elif entity == 'subject':
        e1, rel = o_embed, rel_embed[1]
    else:
        raise ValueError(entity)
    B, E = copy_vocabulary.shape
    assert E == OUTPUT_DIM

    # one (B, 96) activation input; additive mask precomputed, lane-padded to 128
    x = jnp.concatenate([e1, rel, time_embed], axis=1).astype(jnp.float32)   # (B, 96)
    mask = jnp.where(copy_vocabulary != 0.0, 1.0, -50.0).astype(jnp.float32)
    mask = jnp.pad(mask, ((0, 0), (0, OUT_PAD - E)), constant_values=NEG_PAD)

    # row tile: small batches pad to a sublane multiple; large batches tile at 128
    bm = min(128, _round_up(B, 8))
    Bp = _round_up(B, bm)
    if Bp != B:
        x = jnp.pad(x, ((0, Bp - B), (0, 0)))
        mask = jnp.pad(mask, ((0, Bp - B), (0, 0)))

    out = pl.pallas_call(
        fused_kernel,
        out_shape=jax.ShapeDtypeStruct((Bp, OUT_PAD), jnp.float32),
        grid=(Bp // bm,),
        in_specs=[
            # activations: stream one row tile per grid step
            pl.BlockSpec((bm, STACK_DIM), lambda i: (i, 0)),
            pl.BlockSpec((bm, OUT_PAD), lambda i: (i, 0)),
            # weights: constant index_map -> DMA'd once, VMEM-resident across the grid
            pl.BlockSpec((STACK_DIM, HIDDEN_SIZE), lambda i: (0, 0)),
            pl.BlockSpec((1, HIDDEN_SIZE), lambda i: (0, 0)),
            pl.BlockSpec((HIDDEN_SIZE, EMBEDDING_DIM), lambda i: (0, 0)),
            pl.BlockSpec((1, EMBEDDING_DIM), lambda i: (0, 0)),
            pl.BlockSpec((EMBEDDING_DIM, OUT_PAD), lambda i: (0, 0)),
            pl.BlockSpec((1, OUT_PAD), lambda i: (0, 0)),
        ],
        out_specs=pl.BlockSpec((bm, OUT_PAD), lambda i: (i, 0)),
        compiler_params=pltpu.CompilerParams(
            dimension_semantics=("parallel",),
            vmem_limit_bytes=32 * 1024 * 1024),
    )(x, mask, kp['W_eff'], kp['bias_eff'], kp['fcw_eff'], kp['fcb_eff'],
      kp['embT'], kp['b_ent'])
    return out[:B, :E]


# ---------------------- offline weight folding (pure JAX, one-time) -----------------
def im2col(x):
    # x: (N, H_IN, W_IN) -> (N*H_OUT*W_OUT, 9), taps ordered (ki, kj) row-major
    taps = [x[:, ki:ki + H_OUT, kj:kj + W_OUT] for ki in range(3) for kj in range(3)]
    p = jnp.stack(taps, axis=-1)
    return p.reshape(-1, 9)


def fold_params(p):
    """Fold bn0 + conv(+bias) + bn1 + NCHW flatten into (96,1920) W_eff / (1,1920) bias,
    fc bias + bn2 into (1920,32) fcw_eff / (1,32) fcb_eff; cast matmul weights to bf16
    and lane-pad the vocabulary dimension 64 -> 128."""
    s0 = p['bn0_scale'][0, 0]
    t0 = p['bn0_shift'][0, 0]
    conv_w9 = p['conv_w'].reshape(N_FILT, 9).T                       # (9, 32)

    def conv_affine(xflat):          # (N, 96) -> (N, 1920), pre-relu, all affines folded
        x = xflat.reshape(-1, H_IN, W_IN) * s0 + t0                  # bn0 (C=1)
        y = im2col(x) @ conv_w9 + p['conv_b'].reshape(1, N_FILT)     # conv + bias
        y = y * p['bn1_scale'] + p['bn1_shift']                      # bn1
        n = xflat.shape[0]
        # PyTorch NCHW flatten order (channel-major)
        return y.reshape(n, H_OUT * W_OUT, N_FILT).transpose(0, 2, 1).reshape(n, HIDDEN_SIZE)

    bias_eff = conv_affine(jnp.zeros((1, STACK_DIM), jnp.float32))                 # (1, 1920)
    W_eff = conv_affine(jnp.eye(STACK_DIM, dtype=jnp.float32)) - bias_eff          # (96, 1920)
    fcw_eff = p['fc_w'] * p['bn2_scale']                                            # (1920, 32)
    fcb_eff = p['fc_b'] * p['bn2_scale'] + p['bn2_shift']                           # (1, 32)
    embT = jnp.pad(p['emb_e'].T, ((0, 0), (0, OUT_PAD - OUTPUT_DIM)))               # (32, 128)
    b_ent = jnp.pad(p['b_ent'], ((0, 0), (0, OUT_PAD - OUTPUT_DIM)))                # (1, 128)
    # TODO(synk): optional fp8 (v7x) / int8 (v5e, v6e) weight quantization not applied here.
    return dict(W_eff=W_eff.astype(jnp.bfloat16),
                bias_eff=bias_eff,
                fcw_eff=fcw_eff.astype(jnp.bfloat16),
                fcb_eff=fcb_eff,
                embT=embT.astype(jnp.bfloat16),
                b_ent=b_ent)


# ------------------------------ pure-JAX reference -----------------------------------
def reference_forward(p, s_embed, rel_embed, o_embed, time_embed, cv, entity):
    e1, rel = (s_embed, rel_embed[0]) if entity == 'object' else (o_embed, rel_embed[1])
    B = e1.shape[0]
    stacked = jnp.concatenate(
        [e1.reshape(B, EMB_DIM1, EMB_DIM2),
         rel.reshape(B, EMB_DIM1, EMB_DIM2),
         time_embed.reshape(B, EMB_DIM1, EMB_DIM2)], axis=1)            # (B, 12, 8)
    x = stacked * p['bn0_scale'][0, 0] + p['bn0_shift'][0, 0]
    conv_w9 = p['conv_w'].reshape(N_FILT, 9).T
    y = im2col(x) @ conv_w9 + p['conv_b'].reshape(1, N_FILT)
    y = jnp.maximum(y * p['bn1_scale'] + p['bn1_shift'], 0.0)
    xflat = y.reshape(B, H_OUT * W_OUT, N_FILT).transpose(0, 2, 1).reshape(B, HIDDEN_SIZE)
    h = xflat @ p['fc_w'] + p['fc_b']
    h = jnp.maximum(h * p['bn2_scale'] + p['bn2_shift'], 0.0)
    logits = h @ p['emb_e'].T + p['b_ent']
    pred = jax.nn.sigmoid(logits)
    score = pred + jnp.where(cv != 0.0, 1.0, -50.0)
    return jax.nn.softmax(score, axis=1)


# ------------------------------ deterministic params ---------------------------------
def _bn_affine(key, n):
    kg, kb, km, kv = jax.random.split(key, 4)
    gamma = 1.0 + 0.1 * jax.random.normal(kg, (n,), jnp.float32)
    beta = 0.05 * jax.random.normal(kb, (n,), jnp.float32)
    mean = 0.02 * jax.random.normal(km, (n,), jnp.float32)
    var = 1.0 + 0.1 * jnp.abs(jax.random.normal(kv, (n,), jnp.float32))
    scale = gamma / jnp.sqrt(var + EPS)
    shift = beta - mean * scale
    return scale.reshape(1, n), shift.reshape(1, n)


def init_params(key):
    ks = jax.random.split(key, 8)
    conv_w = 0.1 * jax.random.normal(ks[0], (N_FILT, 1, 3, 3), jnp.float32)  # conv1.weight
    conv_b = 0.01 * jax.random.normal(ks[1], (N_FILT,), jnp.float32)
    bn0_scale, bn0_shift = _bn_affine(ks[2], 1)
    bn1_scale, bn1_shift = _bn_affine(ks[3], N_FILT)
    bn2_scale, bn2_shift = _bn_affine(ks[4], EMBEDDING_DIM)
    fc_w = 0.02 * jax.random.normal(ks[5], (HIDDEN_SIZE, EMBEDDING_DIM), jnp.float32)
    fc_b = (0.01 * jax.random.normal(ks[6], (EMBEDDING_DIM,), jnp.float32)).reshape(1, -1)
    emb_e = 0.1 * jax.random.normal(ks[7], (OUTPUT_DIM, EMBEDDING_DIM), jnp.float32)
    emb_e = emb_e.at[0].set(0.0)                       # padding_idx=0
    b_ent = jnp.zeros((1, OUTPUT_DIM), jnp.float32)    # Parameter('b') init = zeros
    # TODO(synk): BatchNorm train-mode batch statistics / dropout masks not modelled
    # (inference semantics); unused Recent_history.W_s omitted.
    return dict(conv_w=conv_w, conv_b=conv_b,
                bn0_scale=bn0_scale, bn0_shift=bn0_shift,
                bn1_scale=bn1_scale, bn1_shift=bn1_shift,
                bn2_scale=bn2_scale, bn2_shift=bn2_shift,
                fc_w=fc_w, fc_b=fc_b, emb_e=emb_e, b_ent=b_ent)


# --------------------------------------- main ----------------------------------------
if __name__ == "__main__":
    key = jax.random.PRNGKey(0)
    kp, k1, k2, k3, k4, k5 = jax.random.split(key, 6)
    raw_params = init_params(kp)
    kernel_params = fold_params(raw_params)

    s_embed = jax.random.normal(k1, (BATCH, EMBEDDING_DIM), jnp.float32)
    o_embed = jax.random.normal(k2, (BATCH, EMBEDDING_DIM), jnp.float32)
    rel_embed = jax.random.normal(k3, (2, BATCH, EMBEDDING_DIM), jnp.float32)
    time_embed = jax.random.normal(k4, (BATCH, EMBEDDING_DIM), jnp.float32)
    copy_vocabulary = (jax.random.uniform(k5, (BATCH, OUTPUT_DIM)) > 0.5).astype(jnp.float32)

    out = recent_history_forward(kernel_params, s_embed, rel_embed, o_embed, time_embed,
                                 copy_vocabulary, 'object')
    out = jax.block_until_ready(out)

    ref = reference_forward(raw_params, s_embed, rel_embed, o_embed, time_embed,
                            copy_vocabulary, 'object')
    assert out.shape == (BATCH, OUTPUT_DIM)
    # exact softmax normalization (padded lanes contribute exactly 0)
    assert jnp.allclose(jnp.sum(out, axis=1), 1.0, atol=1e-4)
    # bf16 weights/activation casts in the dots -> small deviation vs f32 reference
    assert jnp.allclose(out, ref, atol=2e-3, rtol=2e-2)
    print("KERNEL_OK")
</pallas_src>

<mosaic_0001>
module attributes {stable_mosaic.version = 11 : i64} {
  func.func @fused_kernel(%arg0: i32, %arg1: memref<8x96xf32, #tpu.memory_space<vmem>>, %arg2: memref<8x128xf32, #tpu.memory_space<vmem>>, %arg3: memref<96x1920xbf16, #tpu.memory_space<vmem>>, %arg4: memref<1x1920xf32, #tpu.memory_space<vmem>>, %arg5: memref<1920x32xbf16, #tpu.memory_space<vmem>>, %arg6: memref<1x32xf32, #tpu.memory_space<vmem>>, %arg7: memref<32x128xbf16, #tpu.memory_space<vmem>>, %arg8: memref<1x128xf32, #tpu.memory_space<vmem>>, %arg9: memref<8x128xf32, #tpu.memory_space<vmem>>) attributes {dimension_semantics = [#tpu.dimension_semantics<parallel>], iteration_bounds = array<i64: 1>, scalar_prefetch = 0 : i64, scratch_operands = 0 : i64, tpu.core_type = #tpu.core_type<tc>, window_params = [{transform_indices = @transform_0, window_bounds = array<i64: 8, 96>}, {transform_indices = @transform_1, window_bounds = array<i64: 8, 128>}, {pipeline_mode = #tpu.pipeline_mode<synchronous>, transform_indices = @transform_2, window_bounds = array<i64: 96, 1920>}, {pipeline_mode = #tpu.pipeline_mode<synchronous>, transform_indices = @transform_3, window_bounds = array<i64: 1, 1920>}, {pipeline_mode = #tpu.pipeline_mode<synchronous>, transform_indices = @transform_4, window_bounds = array<i64: 1920, 32>}, {pipeline_mode = #tpu.pipeline_mode<synchronous>, transform_indices = @transform_5, window_bounds = array<i64: 1, 32>}, {pipeline_mode = #tpu.pipeline_mode<synchronous>, transform_indices = @transform_6, window_bounds = array<i64: 32, 128>}, {pipeline_mode = #tpu.pipeline_mode<synchronous>, transform_indices = @transform_7, window_bounds = array<i64: 1, 128>}, {transform_indices = @transform_8, window_bounds = array<i64: 8, 128>}]} {
    %c0 = arith.constant 0 : index
    %c0_0 = arith.constant 0 : index
    %0 = vector.load %arg1[%c0, %c0_0] : memref<8x96xf32, #tpu.memory_space<vmem>>, vector<8x96xf32>
    %1 = arith.truncf %0 : vector<8x96xf32> to vector<8x96xbf16>
    %c0_1 = arith.constant 0 : index
    %c0_2 = arith.constant 0 : index
    %2 = vector.load %arg3[%c0_1, %c0_2] : memref<96x1920xbf16, #tpu.memory_space<vmem>>, vector<96x1920xbf16>
    %cst = arith.constant dense<0.000000e+00> : vector<8x1920xf32>
    %3 = tpu.matmul %1, %2, %cst {dimension_numbers = #tpu.dot_dimension_numbers<[1], [0], [0], [1], [0, 0, 1, 1], [], []>} : vector<8x96xbf16>, vector<96x1920xbf16>, vector<8x1920xf32> -> vector<8x1920xf32>
    %c0_3 = arith.constant 0 : index
    %c0_4 = arith.constant 0 : index
    %4 = vector.load %arg4[%c0_3, %c0_4] : memref<1x1920xf32, #tpu.memory_space<vmem>>, vector<1x1920xf32>
    %5 = vector.broadcast %4 : vector<1x1920xf32> to vector<8x1920xf32>
    %6 = arith.addf %3, %5 : vector<8x1920xf32>
    %cst_5 = arith.constant 0.000000e+00 : f32
    %7 = vector.broadcast %cst_5 : f32 to vector<8x1920xf32>
    %8 = arith.maximumf %6, %7 : vector<8x1920xf32>
    %9 = arith.truncf %8 : vector<8x1920xf32> to vector<8x1920xbf16>
    %c0_6 = arith.constant 0 : index
    %c0_7 = arith.constant 0 : index
    %10 = vector.load %arg5[%c0_6, %c0_7] : memref<1920x32xbf16, #tpu.memory_space<vmem>>, vector<1920x32xbf16>
    %cst_8 = arith.constant dense<0.000000e+00> : vector<8x32xf32>
    %11 = tpu.matmul %9, %10, %cst_8 {dimension_numbers = #tpu.dot_dimension_numbers<[1], [0], [0], [1], [0, 0, 1, 1], [], []>} : vector<8x1920xbf16>, vector<1920x32xbf16>, vector<8x32xf32> -> vector<8x32xf32>
    %c0_9 = arith.constant 0 : index
    %c0_10 = arith.constant 0 : index
    %12 = vector.load %arg6[%c0_9, %c0_10] : memref<1x32xf32, #tpu.memory_space<vmem>>, vector<1x32xf32>
    %13 = vector.broadcast %12 : vector<1x32xf32> to vector<8x32xf32>
    %14 = arith.addf %11, %13 : vector<8x32xf32>
    %cst_11 = arith.constant 0.000000e+00 : f32
    %15 = vector.broadcast %cst_11 : f32 to vector<8x32xf32>
    %16 = arith.maximumf %14, %15 : vector<8x32xf32>
    %17 = arith.truncf %16 : vector<8x32xf32> to vector<8x32xbf16>
    %c0_12 = arith.constant 0 : index
    %c0_13 = arith.constant 0 : index
    %18 = vector.load %arg7[%c0_12, %c0_13] : memref<32x128xbf16, #tpu.memory_space<vmem>>, vector<32x128xbf16>
    %cst_14 = arith.constant dense<0.000000e+00> : vector<8x128xf32>
    %19 = tpu.matmul %17, %18, %cst_14 {dimension_numbers = #tpu.dot_dimension_numbers<[1], [0], [0], [1], [0, 0, 1, 1], [], []>} : vector<8x32xbf16>, vector<32x128xbf16>, vector<8x128xf32> -> vector<8x128xf32>
    %c0_15 = arith.constant 0 : index
    %c0_16 = arith.constant 0 : index
    %20 = vector.load %arg8[%c0_15, %c0_16] : memref<1x128xf32, #tpu.memory_space<vmem>>, vector<1x128xf32>
    %21 = vector.broadcast %20 : vector<1x128xf32> to vector<8x128xf32>
    %22 = arith.addf %19, %21 : vector<8x128xf32>
    %cst_17 = arith.constant 0.000000e+00 : f32
    %23 = vector.broadcast %cst_17 : f32 to vector<8x128xf32>
    %24 = arith.subf %23, %22 : vector<8x128xf32>
    %25 = math.exp %24 : vector<8x128xf32>
    %cst_18 = arith.constant 1.000000e+00 : f32
    %26 = vector.broadcast %cst_18 : f32 to vector<8x128xf32>
    %27 = arith.addf %26, %25 : vector<8x128xf32>
    %cst_19 = arith.constant 1.000000e+00 : f32
    %28 = vector.broadcast %cst_19 : f32 to vector<8x128xf32>
    %29 = arith.divf %28, %27 : vector<8x128xf32>
    %c0_20 = arith.constant 0 : index
    %c0_21 = arith.constant 0 : index
    %30 = vector.load %arg2[%c0_20, %c0_21] : memref<8x128xf32, #tpu.memory_space<vmem>>, vector<8x128xf32>
    %31 = arith.addf %29, %30 : vector<8x128xf32>
    %cst_22 = arith.constant dense<0xFF800000> : vector<8xf32>
    %32 = vector.multi_reduction <maximumf>, %31, %cst_22 [1] : vector<8x128xf32> to vector<8xf32>
    %33 = vector.shape_cast %32 : vector<8xf32> to vector<8x1xf32>
    %34 = vector.broadcast %33 : vector<8x1xf32> to vector<8x128xf32>
    %35 = arith.subf %31, %34 : vector<8x128xf32>
    %36 = math.exp %35 : vector<8x128xf32>
    %cst_23 = arith.constant dense<0.000000e+00> : vector<8xf32>
    %37 = vector.multi_reduction <add>, %36, %cst_23 [1] : vector<8x128xf32> to vector<8xf32>
    %38 = vector.shape_cast %37 : vector<8xf32> to vector<8x1xf32>
    %39 = vector.broadcast %38 : vector<8x1xf32> to vector<8x128xf32>
    %40 = arith.divf %36, %39 : vector<8x128xf32>
    %c0_24 = arith.constant 0 : index
    %c0_25 = arith.constant 0 : index
    %41 = vector.load %arg9[%c0_24, %c0_25] : memref<8x128xf32, #tpu.memory_space<vmem>>, vector<8x128xf32>
    tpu.vector_store %arg9[%c0_24, %c0_25], %40 {strides = array<i32>} : memref<8x128xf32, #tpu.memory_space<vmem>>, vector<8x128xf32>,
    return
  }
  func.func @transform_0(%arg0: i32) -> (i32, i32) {
    %c0_i32 = arith.constant 0 : i32
    %c0_i32_0 = arith.constant 0 : i32
    return %arg0, %c0_i32 : i32, i32
  }
  func.func @transform_1(%arg0: i32) -> (i32, i32) {
    %c0_i32 = arith.constant 0 : i32
    %c0_i32_0 = arith.constant 0 : i32
    return %arg0, %c0_i32 : i32, i32
  }
  func.func @transform_2(%arg0: i32) -> (i32, i32) {
    %c0_i32 = arith.constant 0 : i32
    %c0_i32_0 = arith.constant 0 : i32
    %c0_i32_1 = arith.constant 0 : i32
    return %c0_i32, %c0_i32_0 : i32, i32
  }
  func.func @transform_3(%arg0: i32) -> (i32, i32) {
    %c0_i32 = arith.constant 0 : i32
    %c0_i32_0 = arith.constant 0 : i32
    %c0_i32_1 = arith.constant 0 : i32
    return %c0_i32, %c0_i32_0 : i32, i32
  }
  func.func @transform_4(%arg0: i32) -> (i32, i32) {
    %c0_i32 = arith.constant 0 : i32
    %c0_i32_0 = arith.constant 0 : i32
    %c0_i32_1 = arith.constant 0 : i32
    return %c0_i32, %c0_i32_0 : i32, i32
  }
  func.func @transform_5(%arg0: i32) -> (i32, i32) {
    %c0_i32 = arith.constant 0 : i32
    %c0_i32_0 = arith.constant 0 : i32
    %c0_i32_1 = arith.constant 0 : i32
    return %c0_i32, %c0_i32_0 : i32, i32
  }
  func.func @transform_6(%arg0: i32) -> (i32, i32) {
    %c0_i32 = arith.constant 0 : i32
    %c0_i32_0 = arith.constant 0 : i32
    %c0_i32_1 = arith.constant 0 : i32
    return %c0_i32, %c0_i32_0 : i32, i32
  }
  func.func @transform_7(%arg0: i32) -> (i32, i32) {
    %c0_i32 = arith.constant 0 : i32
    %c0_i32_0 = arith.constant 0 : i32
    %c0_i32_1 = arith.constant 0 : i32
    return %c0_i32, %c0_i32_0 : i32, i32
  }
  func.func @transform_8(%arg0: i32) -> (i32, i32) {
    %c0_i32 = arith.constant 0 : i32
    %c0_i32_0 = arith.constant 0 : i32
    return %arg0, %c0_i32 : i32, i32
  }
}

</mosaic_0001>

<llo_original>
// kernel: tpu_custom_call.1
$region0: #{tpu_custom_call.1}
  #allocation0 [shape = 'u32[]', space=smem, size = 0x4, offset = 0x4, fixed_abs, tag = 'smem constant byte address 0x4 - core index']
  #allocation1 [shape = 'u32[144,128]{1,0:T(1,128)}', space=vmem, size = 0x12000, scoped, tag = 'internal scratch']
  %s0 = inlined_call_operand.vmem [shape: f32[8,96], index: 0, kind: input, shape index: {}]
  %s1 = inlined_call_operand.vmem [shape: f32[8,128], index: 1, kind: input, shape index: {}]
  %s2 = inlined_call_operand.vmem [shape: bf16[96,1920], index: 2, kind: input, shape index: {}]
  %s3 = inlined_call_operand.vmem [shape: f32[1,1920], index: 3, kind: input, shape index: {}]
  %s4 = inlined_call_operand.vmem [shape: bf16[1920,32], index: 4, kind: input, shape index: {}]
  %s5 = inlined_call_operand.vmem [shape: f32[1,32], index: 5, kind: input, shape index: {}]
  %s6 = inlined_call_operand.vmem [shape: bf16[32,128], index: 6, kind: input, shape index: {}]
  %s7 = inlined_call_operand.vmem [shape: f32[1,128], index: 7, kind: input, shape index: {}]
  %s8 = inlined_call_operand.hbm [shape: f32[8,128], index: 8, kind: output, shape index: {}]
  %s9 = sld [smem:[#allocation0]]
  $region42: #{tpu_custom_call.1} parent=0
    _
  %s11 = ssub.s32 1, %s9
  %s12 = scalar_select 0, %s11, %s9
  $region1: #{tpu_custom_call.1} parent=0
    #allocation2 [shape = 'u8[4096]{0}', space=vmem, size = 0x1000, scoped, tag = 'output window, operand 0, single buffered']
    #allocation3 [shape = 's32[1]{0}', space=sflag, size = 0x4, scoped, tag = 'scoped memory for tpu_custom_call.1']
    %13 = vsyncpa [#allocation3], 0
    // Predicated region
    $region2: #{tpu_custom_call.1} parent=1 // pred_check
      _
    $region3: #{tpu_custom_call.1} parent=1 // pred_check_branch
      %15 = sbr.rel (0) target = $region5
    $region4: #{tpu_custom_call.1} parent=1 // pred_region
      _
    $region5: #{tpu_custom_call.1} parent=1 // pred_fallthru
      _
    // Predicated region
    $region6: #{tpu_custom_call.1} parent=1 // pred_check
      _
    $region7: #{tpu_custom_call.1} parent=1 // pred_check_branch
      %17 = sbr.rel (0) target = $region9
    $region8: #{tpu_custom_call.1} parent=1 // pred_region
      _
    $region9: #{tpu_custom_call.1} parent=1 // pred_fallthru
      _
    // Predicated region
    $region10: #{tpu_custom_call.1} parent=1 // pred_check
      _
    $region11: #{tpu_custom_call.1} parent=1 // pred_check_branch
      %19 = sbr.rel (0) target = $region13
    $region12: #{tpu_custom_call.1} parent=1 // pred_region
      _
    $region13: #{tpu_custom_call.1} parent=1 // pred_fallthru
      _
    // Predicated region
    $region14: #{tpu_custom_call.1} parent=1 // pred_check
      _
    $region15: #{tpu_custom_call.1} parent=1 // pred_check_branch
      %21 = sbr.rel (0) target = $region17
    $region16: #{tpu_custom_call.1} parent=1 // pred_region
      _
    $region17: #{tpu_custom_call.1} parent=1 // pred_fallthru
      _
    // Predicated region
    $region18: #{tpu_custom_call.1} parent=1 // pred_check
      _
    $region19: #{tpu_custom_call.1} parent=1 // pred_check_branch
      %23 = sbr.rel (0) target = $region21
    $region20: #{tpu_custom_call.1} parent=1 // pred_region
      _
    $region21: #{tpu_custom_call.1} parent=1 // pred_fallthru
      _
    // Predicated region
    $region22: #{tpu_custom_call.1} parent=1 // pred_check
      _
    $region23: #{tpu_custom_call.1} parent=1 // pred_check_branch
      %25 = sbr.rel (0) target = $region25
    $region24: #{tpu_custom_call.1} parent=1 // pred_region
      _
    $region25: #{tpu_custom_call.1} parent=1 // pred_fallthru
      _
    // Predicated region
    $region26: #{tpu_custom_call.1} parent=1 // pred_check
      _
    $region27: #{tpu_custom_call.1} parent=1 // pred_check_branch
      %27 = sbr.rel (0) target = $region29
    $region28: #{tpu_custom_call.1} parent=1 // pred_region
      _
    $region29: #{tpu_custom_call.1} parent=1 // pred_fallthru
      _
    // Predicated region
    $region30: #{tpu_custom_call.1} parent=1 // pred_check
      _
    $region31: #{tpu_custom_call.1} parent=1 // pred_check_branch
      %29 = sbr.rel (0) target = $region33
    $region32: #{tpu_custom_call.1} parent=1 // pred_region
      _
    $region33: #{tpu_custom_call.1} parent=1 // pred_fallthru
      _
    %v31 = vld [vmem:[%s0] sm:$0xff]
    %v32 = vpack.c.bf16 %v31, %v31
    %v33 = vld [vmem:[%s2] sm:$0xff]
    %v34 = vld [vmem:[%s2 + $0x8] sm:$0xff]
    %v35 = vld [vmem:[%s2 + $0x10] sm:$0xff]
    %v36 = vld [vmem:[%s2 + $0x18] sm:$0xff]
    %v37 = vld [vmem:[%s2 + $0x20] sm:$0xff]
    %v38 = vld [vmem:[%s2 + $0x28] sm:$0xff]
    %v39 = vld [vmem:[%s2 + $0x30] sm:$0xff]
    %v40 = vld [vmem:[%s2 + $0x38] sm:$0xf]
    %v41 = vld [vmem:[%s2 + $0x3c] sm:$0xff]
    %v42 = vld [vmem:[%s2 + $0x44] sm:$0xff]
    %v43 = vld [vmem:[%s2 + $0x4c] sm:$0xff]
    %v44 = vld [vmem:[%s2 + $0x54] sm:$0xff]
    %v45 = vld [vmem:[%s2 + $0x5c] sm:$0xff]
    %v46 = vld [vmem:[%s2 + $0x64] sm:$0xff]
    %v47 = vld [vmem:[%s2 + $0x6c] sm:$0xff]
    %v48 = vld [vmem:[%s2 + $0x74] sm:$0xf]
    %v49 = vld [vmem:[%s2 + $0x78] sm:$0xff]
    %v50 = vld [vmem:[%s2 + $0x80] sm:$0xff]
    %v51 = vld [vmem:[%s2 + $0x88] sm:$0xff]
    %v52 = vld [vmem:[%s2 + $0x90] sm:$0xff]
    %v53 = vld [vmem:[%s2 + $0x98] sm:$0xff]
    %v54 = vld [vmem:[%s2 + $0xa0] sm:$0xff]
    %v55 = vld [vmem:[%s2 + $0xa8] sm:$0xff]
    %v56 = vld [vmem:[%s2 + $0xb0] sm:$0xf]
    %v57 = vld [vmem:[%s2 + $0xb4] sm:$0xff]
    %v58 = vld [vmem:[%s2 + $0xbc] sm:$0xff]
    %v59 = vld [vmem:[%s2 + $0xc4] sm:$0xff]
    %v60 = vld [vmem:[%s2 + $0xcc] sm:$0xff]
    %v61 = vld [vmem:[%s2 + $0xd4] sm:$0xff]
    %v62 = vld [vmem:[%s2 + $0xdc] sm:$0xff]
    %v63 = vld [vmem:[%s2 + $0xe4] sm:$0xff]
    %v64 = vld [vmem:[%s2 + $0xec] sm:$0xf]
    %v65 = vld [vmem:[%s2 + $0xf0] sm:$0xff]
    %v66 = vld [vmem:[%s2 + $0xf8] sm:$0xff]
    %v67 = vld [vmem:[%s2 + $0x100] sm:$0xff]
    %v68 = vld [vmem:[%s2 + $0x108] sm:$0xff]
    %v69 = vld [vmem:[%s2 + $0x110] sm:$0xff]
    %v70 = vld [vmem:[%s2 + $0x118] sm:$0xff]
    %v71 = vld [vmem:[%s2 + $0x120] sm:$0xff]
    %v72 = vld [vmem:[%s2 + $0x128] sm:$0xf]
    %v73 = vld [vmem:[%s2 + $0x12c] sm:$0xff]
    %v74 = vld [vmem:[%s2 + $0x134] sm:$0xff]
    %v75 = vld [vmem:[%s2 + $0x13c] sm:$0xff]
    %v76 = vld [vmem:[%s2 + $0x144] sm:$0xff]
    %v77 = vld [vmem:[%s2 + $0x14c] sm:$0xff]
    %v78 = vld [vmem:[%s2 + $0x154] sm:$0xff]
    %v79 = vld [vmem:[%s2 + $0x15c] sm:$0xff]
    %v80 = vld [vmem:[%s2 + $0x164] sm:$0xf]
    %v81 = vld [vmem:[%s2 + $0x168] sm:$0xff]
    %v82 = vld [vmem:[%s2 + $0x170] sm:$0xff]
    %v83 = vld [vmem:[%s2 + $0x178] sm:$0xff]
    %v84 = vld [vmem:[%s2 + $0x180] sm:$0xff]
    %v85 = vld [vmem:[%s2 + $0x188] sm:$0xff]
    %v86 = vld [vmem:[%s2 + $0x190] sm:$0xff]
    %v87 = vld [vmem:[%s2 + $0x198] sm:$0xff]
    %v88 = vld [vmem:[%s2 + $0x1a0] sm:$0xf]
    %v89 = vld [vmem:[%s2 + $0x1a4] sm:$0xff]
    %v90 = vld [vmem:[%s2 + $0x1ac] sm:$0xff]
    %v91 = vld [vmem:[%s2 + $0x1b4] sm:$0xff]
    %v92 = vld [vmem:[%s2 + $0x1bc] sm:$0xff]
    %v93 = vld [vmem:[%s2 + $0x1c4] sm:$0xff]
    %v94 = vld [vmem:[%s2 + $0x1cc] sm:$0xff]
    %v95 = vld [vmem:[%s2 + $0x1d4] sm:$0xff]
    %v96 = vld [vmem:[%s2 + $0x1dc] sm:$0xf]
    %v97 = vld [vmem:[%s2 + $0x1e0] sm:$0xff]
    %v98 = vld [vmem:[%s2 + $0x1e8] sm:$0xff]
    %v99 = vld [vmem:[%s2 + $0x1f0] sm:$0xff]
    %v100 = vld [vmem:[%s2 + $0x1f8] sm:$0xff]
    %v101 = vld [vmem:[%s2 + $0x200] sm:$0xff]
    %v102 = vld [vmem:[%s2 + $0x208] sm:$0xff]
    %v103 = vld [vmem:[%s2 + $0x210] sm:$0xff]
    %v104 = vld [vmem:[%s2 + $0x218] sm:$0xf]
    %v105 = vld [vmem:[%s2 + $0x21c] sm:$0xff]
    %v106 = vld [vmem:[%s2 + $0x224] sm:$0xff]
    %v107 = vld [vmem:[%s2 + $0x22c] sm:$0xff]
    %v108 = vld [vmem:[%s2 + $0x234] sm:$0xff]
    %v109 = vld [vmem:[%s2 + $0x23c] sm:$0xff]
    %v110 = vld [vmem:[%s2 + $0x244] sm:$0xff]
    %v111 = vld [vmem:[%s2 + $0x24c] sm:$0xff]
    %v112 = vld [vmem:[%s2 + $0x254] sm:$0xf]
    %v113 = vld [vmem:[%s2 + $0x258] sm:$0xff]
    %v114 = vld [vmem:[%s2 + $0x260] sm:$0xff]
    %v115 = vld [vmem:[%s2 + $0x268] sm:$0xff]
    %v116 = vld [vmem:[%s2 + $0x270] sm:$0xff]
    %v117 = vld [vmem:[%s2 + $0x278] sm:$0xff]
    %v118 = vld [vmem:[%s2 + $0x280] sm:$0xff]
    %v119 = vld [vmem:[%s2 + $0x288] sm:$0xff]
    %v120 = vld [vmem:[%s2 + $0x290] sm:$0xf]
    %v121 = vld [vmem:[%s2 + $0x294] sm:$0xff]
    %v122 = vld [vmem:[%s2 + $0x29c] sm:$0xff]
    %v123 = vld [vmem:[%s2 + $0x2a4] sm:$0xff]
    %v124 = vld [vmem:[%s2 + $0x2ac] sm:$0xff]
    %v125 = vld [vmem:[%s2 + $0x2b4] sm:$0xff]
    %v126 = vld [vmem:[%s2 + $0x2bc] sm:$0xff]
    %v127 = vld [vmem:[%s2 + $0x2c4] sm:$0xff]
    %v128 = vld [vmem:[%s2 + $0x2cc] sm:$0xf]
    %v129 = vld [vmem:[%s3] sm:$0xff]
    %v130 = vld [vmem:[%s3 + $0x8] sm:$0xff]
    %v133 = vlaneseq
    %v134 = vshrl.u32 %v133, 7
    %v135 = vsub.s32 0, %v134
    %v136 = vrot.slane %v129, %v135
    %v137 = vlaneseq
    %v138 = vshrl.u32 %v137, 7
    %v139 = vsub.s32 1, %v138
    %v140 = vrot.slane %v129, %v139
    %v141 = vlaneseq
    %v142 = vshrl.u32 %v141, 7
    %v143 = vsub.s32 2, %v142
    %v144 = vrot.slane %v129, %v143
    %v145 = vlaneseq
    %v146 = vshrl.u32 %v145, 7
    %v147 = vsub.s32 3, %v146
    %v148 = vrot.slane %v129, %v147
    %v149 = vlaneseq
    %v150 = vshrl.u32 %v149, 7
    %v151 = vsub.s32 4, %v150
    %v152 = vrot.slane %v129, %v151
    %v153 = vlaneseq
    %v154 = vshrl.u32 %v153, 7
    %v155 = vsub.s32 5, %v154
    %v156 = vrot.slane %v129, %v155
    %v157 = vlaneseq
    %v158 = vshrl.u32 %v157, 7
    %v159 = vsub.s32 6, %v158
    %v160 = vrot.slane %v129, %v159
    %v161 = vlaneseq
    %v162 = vshrl.u32 %v161, 7
    %v163 = vsub.s32 7, %v162
    %v164 = vrot.slane %v129, %v163
    %v165 = vlaneseq
    %v166 = vshrl.u32 %v165, 7
    %v167 = vsub.s32 0, %v166
    %v168 = vrot.slane %v130, %v167
    %v169 = vlaneseq
    %v170 = vshrl.u32 %v169, 7
    %v171 = vsub.s32 1, %v170
    %v172 = vrot.slane %v130, %v171
    %v173 = vlaneseq
    %v174 = vshrl.u32 %v173, 7
    %v175 = vsub.s32 2, %v174
    %v176 = vrot.slane %v130, %v175
    %v177 = vlaneseq
    %v178 = vshrl.u32 %v177, 7
    %v179 = vsub.s32 3, %v178
    %v180 = vrot.slane %v130, %v179
    %v181 = vlaneseq
    %v182 = vshrl.u32 %v181, 7
    %v183 = vsub.s32 4, %v182
    %v184 = vrot.slane %v130, %v183
    %v185 = vlaneseq
    %v186 = vshrl.u32 %v185, 7
    %v187 = vsub.s32 5, %v186
    %v188 = vrot.slane %v130, %v187
    %v189 = vlaneseq
    %v190 = vshrl.u32 %v189, 7
    %v191 = vsub.s32 6, %v190
    %v192 = vrot.slane %v130, %v191
    %v304 = vunpack.c.l.b16 %v33
    %v305 = vunpack.c.h.b16 %v33
    %v306 = vunpack.c.l.b16 %v34
    %v307 = vunpack.c.h.b16 %v34
    %v308 = vunpack.c.l.b16 %v35
    %v309 = vunpack.c.h.b16 %v35
    %v310 = vunpack.c.l.b16 %v36
    %v311 = vunpack.c.h.b16 %v36
    %v312 = vunpack.c.l.b16 %v37
    %v313 = vunpack.c.h.b16 %v37
    %v314 = vunpack.c.l.b16 %v38
    %v315 = vunpack.c.h.b16 %v38
    %v316 = vunpack.c.l.b16 %v39
    %v317 = vunpack.c.h.b16 %v39
    %v318 = vunpack.c.l.b16 %v40
    %v319 = vunpack.c.l.b16 %v41
    %v320 = vunpack.c.h.b16 %v41
    %v321 = vunpack.c.l.b16 %v42
    %v322 = vunpack.c.h.b16 %v42
    %v323 = vunpack.c.l.b16 %v43
    %v324 = vunpack.c.h.b16 %v43
    %v325 = vunpack.c.l.b16 %v44
    %v326 = vunpack.c.h.b16 %v44
    %v327 = vunpack.c.l.b16 %v45
    %v328 = vunpack.c.h.b16 %v45
    %v329 = vunpack.c.l.b16 %v46
    %v330 = vunpack.c.h.b16 %v46
    %v331 = vunpack.c.l.b16 %v47
    %v332 = vunpack.c.h.b16 %v47
    %v333 = vunpack.c.l.b16 %v48
    %v334 = vunpack.c.l.b16 %v49
    %v335 = vunpack.c.h.b16 %v49
    %v336 = vunpack.c.l.b16 %v50
    %v337 = vunpack.c.h.b16 %v50
    %v338 = vunpack.c.l.b16 %v51
    %v339 = vunpack.c.h.b16 %v51
    %v340 = vunpack.c.l.b16 %v52
    %v341 = vunpack.c.h.b16 %v52
    %v342 = vunpack.c.l.b16 %v53
    %v343 = vunpack.c.h.b16 %v53
    %v344 = vunpack.c.l.b16 %v54
    %v345 = vunpack.c.h.b16 %v54
    %v346 = vunpack.c.l.b16 %v55
    %v347 = vunpack.c.h.b16 %v55
    %v348 = vunpack.c.l.b16 %v56
    %v349 = vunpack.c.l.b16 %v57
    %v350 = vunpack.c.h.b16 %v57
    %v351 = vunpack.c.l.b16 %v58
    %v352 = vunpack.c.h.b16 %v58
    %v353 = vunpack.c.l.b16 %v59
    %v354 = vunpack.c.h.b16 %v59
    %v355 = vunpack.c.l.b16 %v60
    %v356 = vunpack.c.h.b16 %v60
    %v357 = vunpack.c.l.b16 %v61
    %v358 = vunpack.c.h.b16 %v61
    %v359 = vunpack.c.l.b16 %v62
    %v360 = vunpack.c.h.b16 %v62
    %v361 = vunpack.c.l.b16 %v63
    %v362 = vunpack.c.h.b16 %v63
    %v363 = vunpack.c.l.b16 %v64
    %v364 = vunpack.c.l.b16 %v65
    %v365 = vunpack.c.h.b16 %v65
    %v366 = vunpack.c.l.b16 %v66
    %v367 = vunpack.c.h.b16 %v66
    %v368 = vunpack.c.l.b16 %v67
    %v369 = vunpack.c.h.b16 %v67
    %v370 = vunpack.c.l.b16 %v68
    %v371 = vunpack.c.h.b16 %v68
    %v372 = vunpack.c.l.b16 %v69
    %v373 = vunpack.c.h.b16 %v69
    %v374 = vunpack.c.l.b16 %v70
    %v375 = vunpack.c.h.b16 %v70
    %v376 = vunpack.c.l.b16 %v71
    %v377 = vunpack.c.h.b16 %v71
    %v378 = vunpack.c.l.b16 %v72
    %v379 = vunpack.c.l.b16 %v73
    %v380 = vunpack.c.h.b16 %v73
    %v381 = vunpack.c.l.b16 %v74
    %v382 = vunpack.c.h.b16 %v74
    %v383 = vunpack.c.l.b16 %v75
    %v384 = vunpack.c.h.b16 %v75
    %v385 = vunpack.c.l.b16 %v76
    %v386 = vunpack.c.h.b16 %v76
    %v387 = vunpack.c.l.b16 %v77
    %v388 = vunpack.c.h.b16 %v77
    %v389 = vunpack.c.l.b16 %v78
    %v390 = vunpack.c.h.b16 %v78
    %v391 = vunpack.c.l.b16 %v79
    %v392 = vunpack.c.h.b16 %v79
    %v393 = vunpack.c.l.b16 %v80
    %v394 = vunpack.c.l.b16 %v81
    %v395 = vunpack.c.h.b16 %v81
    %v396 = vunpack.c.l.b16 %v82
    %v397 = vunpack.c.h.b16 %v82
    %v398 = vunpack.c.l.b16 %v83
    %v399 = vunpack.c.h.b16 %v83
    %v400 = vunpack.c.l.b16 %v84
    %v401 = vunpack.c.h.b16 %v84
    %v402 = vunpack.c.l.b16 %v85
    %v403 = vunpack.c.h.b16 %v85
    %v404 = vunpack.c.l.b16 %v86
    %v405 = vunpack.c.h.b16 %v86
    %v406 = vunpack.c.l.b16 %v87
    %v407 = vunpack.c.h.b16 %v87
    %v408 = vunpack.c.l.b16 %v88
    %v409 = vunpack.c.l.b16 %v89
    %v410 = vunpack.c.h.b16 %v89
    %v411 = vunpack.c.l.b16 %v90
    %v412 = vunpack.c.h.b16 %v90
    %v413 = vunpack.c.l.b16 %v91
    %v414 = vunpack.c.h.b16 %v91
    %v415 = vunpack.c.l.b16 %v92
    %v416 = vunpack.c.h.b16 %v92
    %v417 = vunpack.c.l.b16 %v93
    %v418 = vunpack.c.h.b16 %v93
    %v419 = vunpack.c.l.b16 %v94
    %v420 = vunpack.c.h.b16 %v94
    %v421 = vunpack.c.l.b16 %v95
    %v422 = vunpack.c.h.b16 %v95
    %v423 = vunpack.c.l.b16 %v96
    %v424 = vunpack.c.l.b16 %v97
    %v425 = vunpack.c.h.b16 %v97
    %v426 = vunpack.c.l.b16 %v98
    %v427 = vunpack.c.h.b16 %v98
    %v428 = vunpack.c.l.b16 %v99
    %v429 = vunpack.c.h.b16 %v99
    %v430 = vunpack.c.l.b16 %v100
    %v431 = vunpack.c.h.b16 %v100
    %v432 = vunpack.c.l.b16 %v101
    %v433 = vunpack.c.h.b16 %v101
    %v434 = vunpack.c.l.b16 %v102
    %v435 = vunpack.c.h.b16 %v102
    %v436 = vunpack.c.l.b16 %v103
    %v437 = vunpack.c.h.b16 %v103
    %v438 = vunpack.c.l.b16 %v104
    %v439 = vunpack.c.l.b16 %v105
    %v440 = vunpack.c.h.b16 %v105
    %v441 = vunpack.c.l.b16 %v106
    %v442 = vunpack.c.h.b16 %v106
    %v443 = vunpack.c.l.b16 %v107
    %v444 = vunpack.c.h.b16 %v107
    %v445 = vunpack.c.l.b16 %v108
    %v446 = vunpack.c.h.b16 %v108
    %v447 = vunpack.c.l.b16 %v109
    %v448 = vunpack.c.h.b16 %v109
    %v449 = vunpack.c.l.b16 %v110
    %v450 = vunpack.c.h.b16 %v110
    %v451 = vunpack.c.l.b16 %v111
    %v452 = vunpack.c.h.b16 %v111
    %v453 = vunpack.c.l.b16 %v112
    %v454 = vunpack.c.l.b16 %v113
    %v455 = vunpack.c.h.b16 %v113
    %v456 = vunpack.c.l.b16 %v114
    %v457 = vunpack.c.h.b16 %v114
    %v458 = vunpack.c.l.b16 %v115
    %v459 = vunpack.c.h.b16 %v115
    %v460 = vunpack.c.l.b16 %v116
    %v461 = vunpack.c.h.b16 %v116
    %v462 = vunpack.c.l.b16 %v117
    %v463 = vunpack.c.h.b16 %v117
    %v464 = vunpack.c.l.b16 %v118
    %v465 = vunpack.c.h.b16 %v118
    %v466 = vunpack.c.l.b16 %v119
    %v467 = vunpack.c.h.b16 %v119
    %v468 = vunpack.c.l.b16 %v120
    %v469 = vunpack.c.l.b16 %v121
    %v470 = vunpack.c.h.b16 %v121
    %v471 = vunpack.c.l.b16 %v122
    %v472 = vunpack.c.h.b16 %v122
    %v473 = vunpack.c.l.b16 %v123
    %v474 = vunpack.c.h.b16 %v123
    %v475 = vunpack.c.l.b16 %v124
    %v476 = vunpack.c.h.b16 %v124
    %v477 = vunpack.c.l.b16 %v125
    %v478 = vunpack.c.h.b16 %v125
    %v479 = vunpack.c.l.b16 %v126
    %v480 = vunpack.c.h.b16 %v126
    %v481 = vunpack.c.l.b16 %v127
    %v482 = vunpack.c.h.b16 %v127
    %v483 = vunpack.c.l.b16 %v128
    %v484 = vpack.c.b16 %v319, %v304
    %v485 = vpack.c.b16 %v320, %v305
    %v486 = vpack.c.b16 %v321, %v306
    %v487 = vpack.c.b16 %v322, %v307
    %v488 = vpack.c.b16 %v323, %v308
    %v489 = vpack.c.b16 %v324, %v309
    %v490 = vpack.c.b16 %v325, %v310
    %v491 = vpack.c.b16 %v326, %v311
    %v492 = vpack.c.b16 %v327, %v312
    %v493 = vpack.c.b16 %v328, %v313
    %v494 = vpack.c.b16 %v329, %v314
    %v495 = vpack.c.b16 %v330, %v315
    %v496 = vpack.c.b16 %v331, %v316
    %v497 = vpack.c.b16 %v332, %v317
    %v498 = vpack.c.b16 %v333, %v318
    %v499 = vpack.c.b16 %v349, %v334
    %v500 = vpack.c.b16 %v350, %v335
    %v501 = vpack.c.b16 %v351, %v336
    %v502 = vpack.c.b16 %v352, %v337
    %v503 = vpack.c.b16 %v353, %v338
    %v504 = vpack.c.b16 %v354, %v339
    %v505 = vpack.c.b16 %v355, %v340
    %v506 = vpack.c.b16 %v356, %v341
    %v507 = vpack.c.b16 %v357, %v342
    %v508 = vpack.c.b16 %v358, %v343
    %v509 = vpack.c.b16 %v359, %v344
    %v510 = vpack.c.b16 %v360, %v345
    %v511 = vpack.c.b16 %v361, %v346
    %v512 = vpack.c.b16 %v362, %v347
    %v513 = vpack.c.b16 %v363, %v348
    %v514 = vpack.c.b16 %v379, %v364
    %v515 = vpack.c.b16 %v380, %v365
    %v516 = vpack.c.b16 %v381, %v366
    %v517 = vpack.c.b16 %v382, %v367
    %v518 = vpack.c.b16 %v383, %v368
    %v519 = vpack.c.b16 %v384, %v369
    %v520 = vpack.c.b16 %v385, %v370
    %v521 = vpack.c.b16 %v386, %v371
    %v522 = vpack.c.b16 %v387, %v372
    %v523 = vpack.c.b16 %v388, %v373
    %v524 = vpack.c.b16 %v389, %v374
    %v525 = vpack.c.b16 %v390, %v375
    %v526 = vpack.c.b16 %v391, %v376
    %v527 = vpack.c.b16 %v392, %v377
    %v528 = vpack.c.b16 %v393, %v378
    %v529 = vpack.c.b16 %v409, %v394
    %v530 = vpack.c.b16 %v410, %v395
    %v531 = vpack.c.b16 %v411, %v396
    %v532 = vpack.c.b16 %v412, %v397
    %v533 = vpack.c.b16 %v413, %v398
    %v534 = vpack.c.b16 %v414, %v399
    %v535 = vpack.c.b16 %v415, %v400
    %v536 = vpack.c.b16 %v416, %v401
    %v537 = vpack.c.b16 %v417, %v402
    %v538 = vpack.c.b16 %v418, %v403
    %v539 = vpack.c.b16 %v419, %v404
    %v540 = vpack.c.b16 %v420, %v405
    %v541 = vpack.c.b16 %v421, %v406
    %v542 = vpack.c.b16 %v422, %v407
    %v543 = vpack.c.b16 %v423, %v408
    %v544 = vpack.c.b16 %v439, %v424
    %v545 = vpack.c.b16 %v440, %v425
    %v546 = vpack.c.b16 %v441, %v426
    %v547 = vpack.c.b16 %v442, %v427
    %v548 = vpack.c.b16 %v443, %v428
    %v549 = vpack.c.b16 %v444, %v429
    %v550 = vpack.c.b16 %v445, %v430
    %v551 = vpack.c.b16 %v446, %v431
    %v552 = vpack.c.b16 %v447, %v432
    %v553 = vpack.c.b16 %v448, %v433
    %v554 = vpack.c.b16 %v449, %v434
    %v555 = vpack.c.b16 %v450, %v435
    %v556 = vpack.c.b16 %v451, %v436
    %v557 = vpack.c.b16 %v452, %v437
    %v558 = vpack.c.b16 %v453, %v438
    %v559 = vpack.c.b16 %v469, %v454
    %v560 = vpack.c.b16 %v470, %v455
    %v561 = vpack.c.b16 %v471, %v456
    %v562 = vpack.c.b16 %v472, %v457
    %v563 = vpack.c.b16 %v473, %v458
    %v564 = vpack.c.b16 %v474, %v459
    %v565 = vpack.c.b16 %v475, %v460
    %v566 = vpack.c.b16 %v476, %v461
    %v567 = vpack.c.b16 %v477, %v462
    %v568 = vpack.c.b16 %v478, %v463
    %v569 = vpack.c.b16 %v479, %v464
    %v570 = vpack.c.b16 %v480, %v465
    %v571 = vpack.c.b16 %v481, %v466
    %v572 = vpack.c.b16 %v482, %v467
    %v573 = vpack.c.b16 %v483, %v468
    %vm664 = vcmask 785408
    %v666 = vsel %vm664, %v32, 0
    %668 = vmatprep.subr.bf16.mxu0 %v485
    %669 = vmatpush1.bf16.msra.mxu0 %v484
    %670 = vmatprep.subr.bf16.mxu0 %v500
    %671 = vmatpush1.bf16.msra.mxu0 %v499
    %672 = vmatprep.subr.bf16.mxu0 %v515
    %673 = vmatpush1.bf16.msra.mxu0 %v514
    %674 = vmatprep.subr.bf16.mxu0 %v530
    %675 = vmatpush1.bf16.msra.mxu0 %v529
    %676 = vmatprep.subr.bf16.mxu0 %v545
    %677 = vmatpush1.bf16.msra.mxu0 %v544
    %678 = vmatprep.subr.bf16.mxu0 %v560
    %679 = vmatpush1.bf16.msra.mxu0 %v559
    %680 = vmatprep.subr.bf16.mxu0 0
    %681 = vmatpush1.bf16.msra.mxu0 0
    %682 = vmatprep.subr.bf16.mxu0 0
    %683 = vmatpush1.bf16.msra.mxu0 0
    %684 = vmatprep.subr.bf16.mxu0 0
    %685 = vmatpush1.bf16.msra.mxu0 0
    %686 = vmatprep.subr.bf16.mxu0 0
    %687 = vmatpush1.bf16.msra.mxu0 0
    %688 = vmatprep.subr.bf16.mxu0 0
    %689 = vmatpush1.bf16.msra.mxu0 0
    %690 = vmatprep.subr.bf16.mxu0 0
    %691 = vmatpush1.bf16.msra.mxu0 0
    %692 = vmatprep.subr.bf16.mxu0 0
    %693 = vmatpush1.bf16.msra.mxu0 0
    %694 = vmatprep.subr.bf16.mxu0 0
    %695 = vmatpush1.bf16.msra.mxu0 0
    %696 = vmatprep.subr.bf16.mxu0 0
    %697 = vmatpush1.bf16.msra.mxu0 0
    %698 = vmatprep.subr.bf16.mxu0 0
    %699 = vmatpush1.bf16.msra.mxu0 0
    %700 = vmatprep.mubr.bf16.mxu0 0
    %701 = vmatmul.mubr.bf16.gmra.mrb[0].mxu0 %v666
    %v702 = vpop.f32.mrb[0].mxu0
    %v703 = vadd.f32 %v136, %v702
    %v704 = vpop.f32.mrb[0].mxu0
    %v705 = vadd.f32 %v140, %v704
    %v706 = vpop.f32.mrb[0].mxu0
    %v707 = vpop.f32.mrb[0].mxu0
    %708 = vdwg.mxu0
    %709 = vmatprep.subr.bf16.mxu0 %v487
    %710 = vmatpush1.bf16.msra.mxu0 %v486
    %711 = vmatprep.subr.bf16.mxu0 %v502
    %712 = vmatpush1.bf16.msra.mxu0 %v501
    %713 = vmatprep.subr.bf16.mxu0 %v517
    %714 = vmatpush1.bf16.msra.mxu0 %v516
    %715 = vmatprep.subr.bf16.mxu0 %v532
    %716 = vmatpush1.bf16.msra.mxu0 %v531
    %717 = vmatprep.subr.bf16.mxu0 %v547
    %718 = vmatpush1.bf16.msra.mxu0 %v546
    %719 = vmatprep.subr.bf16.mxu0 %v562
    %720 = vmatpush1.bf16.msra.mxu0 %v561
    %721 = vmatprep.subr.bf16.mxu0 0
    %722 = vmatpush1.bf16.msra.mxu0 0
    %723 = vmatprep.subr.bf16.mxu0 0
    %724 = vmatpush1.bf16.msra.mxu0 0
    %725 = vmatprep.subr.bf16.mxu0 0
    %726 = vmatpush1.bf16.msra.mxu0 0
    %727 = vmatprep.subr.bf16.mxu0 0
    %728 = vmatpush1.bf16.msra.mxu0 0
    %729 = vmatprep.subr.bf16.mxu0 0
    %730 = vmatpush1.bf16.msra.mxu0 0
    %731 = vmatprep.subr.bf16.mxu0 0
    %732 = vmatpush1.bf16.msra.mxu0 0
    %733 = vmatprep.subr.bf16.mxu0 0
    %734 = vmatpush1.bf16.msra.mxu0 0
    %735 = vmatprep.subr.bf16.mxu0 0
    %736 = vmatpush1.bf16.msra.mxu0 0
    %737 = vmatprep.subr.bf16.mxu0 0
    %738 = vmatpush1.bf16.msra.mxu0 0
    %739 = vmatprep.subr.bf16.mxu0 0
    %740 = vmatpush1.bf16.msra.mxu0 0
    %741 = vmatprep.mubr.bf16.mxu0 0
    %742 = vmatmul.mubr.bf16.gmra.mrb[0].mxu0 %v666
    %v743 = vpop.f32.mrb[0].mxu0
    %v744 = vadd.f32 %v144, %v743
    %v745 = vpop.f32.mrb[0].mxu0
    %v746 = vadd.f32 %v148, %v745
    %v747 = vpop.f32.mrb[0].mxu0
    %v748 = vpop.f32.mrb[0].mxu0
    %749 = vdwg.mxu0
    %750 = vmatprep.subr.bf16.mxu0 %v489
    %751 = vmatpush1.bf16.msra.mxu0 %v488
    %752 = vmatprep.subr.bf16.mxu0 %v504
    %753 = vmatpush1.bf16.msra.mxu0 %v503
    %754 = vmatprep.subr.bf16.mxu0 %v519
    %755 = vmatpush1.bf16.msra.mxu0 %v518
    %756 = vmatprep.subr.bf16.mxu0 %v534
    %757 = vmatpush1.bf16.msra.mxu0 %v533
    %758 = vmatprep.subr.bf16.mxu0 %v549
    %759 = vmatpush1.bf16.msra.mxu0 %v548
    %760 = vmatprep.subr.bf16.mxu0 %v564
    %761 = vmatpush1.bf16.msra.mxu0 %v563
    %762 = vmatprep.subr.bf16.mxu0 0
    %763 = vmatpush1.bf16.msra.mxu0 0
    %764 = vmatprep.subr.bf16.mxu0 0
    %765 = vmatpush1.bf16.msra.mxu0 0
    %766 = vmatprep.subr.bf16.mxu0 0
    %767 = vmatpush1.bf16.msra.mxu0 0
    %768 = vmatprep.subr.bf16.mxu0 0
    %769 = vmatpush1.bf16.msra.mxu0 0
    %770 = vmatprep.subr.bf16.mxu0 0
    %771 = vmatpush1.bf16.msra.mxu0 0
    %772 = vmatprep.subr.bf16.mxu0 0
    %773 = vmatpush1.bf16.msra.mxu0 0
    %774 = vmatprep.subr.bf16.mxu0 0
    %775 = vmatpush1.bf16.msra.mxu0 0
    %776 = vmatprep.subr.bf16.mxu0 0
    %777 = vmatpush1.bf16.msra.mxu0 0
    %778 = vmatprep.subr.bf16.mxu0 0
    %779 = vmatpush1.bf16.msra.mxu0 0
    %780 = vmatprep.subr.bf16.mxu0 0
    %781 = vmatpush1.bf16.msra.mxu0 0
    %782 = vmatprep.mubr.bf16.mxu0 0
    %783 = vmatmul.mubr.bf16.gmra.mrb[0].mxu0 %v666
    %v784 = vpop.f32.mrb[0].mxu0
    %v785 = vadd.f32 %v152, %v784
    %v786 = vpop.f32.mrb[0].mxu0
    %v787 = vadd.f32 %v156, %v786
    %v788 = vpop.f32.mrb[0].mxu0
    %v789 = vpop.f32.mrb[0].mxu0
    %790 = vdwg.mxu0
    %791 = vmatprep.subr.bf16.mxu0 %v491
    %792 = vmatpush1.bf16.msra.mxu0 %v490
    %793 = vmatprep.subr.bf16.mxu0 %v506
    %794 = vmatpush1.bf16.msra.mxu0 %v505
    %795 = vmatprep.subr.bf16.mxu0 %v521
    %796 = vmatpush1.bf16.msra.mxu0 %v520
    %797 = vmatprep.subr.bf16.mxu0 %v536
    %798 = vmatpush1.bf16.msra.mxu0 %v535
    %799 = vmatprep.subr.bf16.mxu0 %v551
    %800 = vmatpush1.bf16.msra.mxu0 %v550
    %801 = vmatprep.subr.bf16.mxu0 %v566
    %802 = vmatpush1.bf16.msra.mxu0 %v565
    %803 = vmatprep.subr.bf16.mxu0 0
    %804 = vmatpush1.bf16.msra.mxu0 0
    %805 = vmatprep.subr.bf16.mxu0 0
    %806 = vmatpush1.bf16.msra.mxu0 0
    %807 = vmatprep.subr.bf16.mxu0 0
    %808 = vmatpush1.bf16.msra.mxu0 0
    %809 = vmatprep.subr.bf16.mxu0 0
    %810 = vmatpush1.bf16.msra.mxu0 0
    %811 = vmatprep.subr.bf16.mxu0 0
    %812 = vmatpush1.bf16.msra.mxu0 0
    %813 = vmatprep.subr.bf16.mxu0 0
    %814 = vmatpush1.bf16.msra.mxu0 0
    %815 = vmatprep.subr.bf16.mxu0 0
    %816 = vmatpush1.bf16.msra.mxu0 0
    %817 = vmatprep.subr.bf16.mxu0 0
    %818 = vmatpush1.bf16.msra.mxu0 0
    %819 = vmatprep.subr.bf16.mxu0 0
    %820 = vmatpush1.bf16.msra.mxu0 0
    %821 = vmatprep.subr.bf16.mxu0 0
    %822 = vmatpush1.bf16.msra.mxu0 0
    %823 = vmatprep.mubr.bf16.mxu0 0
    %824 = vmatmul.mubr.bf16.gmra.mrb[0].mxu0 %v666
    %v825 = vpop.f32.mrb[0].mxu0
    %v826 = vadd.f32 %v160, %v825
    %v827 = vpop.f32.mrb[0].mxu0
    %v828 = vadd.f32 %v164, %v827
    %v829 = vpop.f32.mrb[0].mxu0
    %v830 = vpop.f32.mrb[0].mxu0
    %831 = vdwg.mxu0
    %832 = vmatprep.subr.bf16.mxu0 %v493
    %833 = vmatpush1.bf16.msra.mxu0 %v492
    %834 = vmatprep.subr.bf16.mxu0 %v508
    %835 = vmatpush1.bf16.msra.mxu0 %v507
    %836 = vmatprep.subr.bf16.mxu0 %v523
    %837 = vmatpush1.bf16.msra.mxu0 %v522
    %838 = vmatprep.subr.bf16.mxu0 %v538
    %839 = vmatpush1.bf16.msra.mxu0 %v537
    %840 = vmatprep.subr.bf16.mxu0 %v553
    %841 = vmatpush1.bf16.msra.mxu0 %v552
    %842 = vmatprep.subr.bf16.mxu0 %v568
    %843 = vmatpush1.bf16.msra.mxu0 %v567
    %844 = vmatprep.subr.bf16.mxu0 0
    %845 = vmatpush1.bf16.msra.mxu0 0
    %846 = vmatprep.subr.bf16.mxu0 0
    %847 = vmatpush1.bf16.msra.mxu0 0
    %848 = vmatprep.subr.bf16.mxu0 0
    %849 = vmatpush1.bf16.msra.mxu0 0
    %850 = vmatprep.subr.bf16.mxu0 0
    %851 = vmatpush1.bf16.msra.mxu0 0
    %852 = vmatprep.subr.bf16.mxu0 0
    %853 = vmatpush1.bf16.msra.mxu0 0
    %854 = vmatprep.subr.bf16.mxu0 0
    %855 = vmatpush1.bf16.msra.mxu0 0
    %856 = vmatprep.subr.bf16.mxu0 0
    %857 = vmatpush1.bf16.msra.mxu0 0
    %858 = vmatprep.subr.bf16.mxu0 0
    %859 = vmatpush1.bf16.msra.mxu0 0
    %860 = vmatprep.subr.bf16.mxu0 0
    %861 = vmatpush1.bf16.msra.mxu0 0
    %862 = vmatprep.subr.bf16.mxu0 0
    %863 = vmatpush1.bf16.msra.mxu0 0
    %864 = vmatprep.mubr.bf16.mxu0 0
    %865 = vmatmul.mubr.bf16.gmra.mrb[0].mxu0 %v666
    %v866 = vpop.f32.mrb[0].mxu0
    %v867 = vadd.f32 %v168, %v866
    %v868 = vpop.f32.mrb[0].mxu0
    %v869 = vadd.f32 %v172, %v868
    %v870 = vpop.f32.mrb[0].mxu0
    %v871 = vpop.f32.mrb[0].mxu0
    %872 = vdwg.mxu0
    %873 = vmatprep.subr.bf16.mxu0 %v495
    %874 = vmatpush1.bf16.msra.mxu0 %v494
    %875 = vmatprep.subr.bf16.mxu0 %v510
    %876 = vmatpush1.bf16.msra.mxu0 %v509
    %877 = vmatprep.subr.bf16.mxu0 %v525
    %878 = vmatpush1.bf16.msra.mxu0 %v524
    %879 = vmatprep.subr.bf16.mxu0 %v540
    %880 = vmatpush1.bf16.msra.mxu0 %v539
    %881 = vmatprep.subr.bf16.mxu0 %v555
    %882 = vmatpush1.bf16.msra.mxu0 %v554
    %883 = vmatprep.subr.bf16.mxu0 %v570
    %884 = vmatpush1.bf16.msra.mxu0 %v569
    %885 = vmatprep.subr.bf16.mxu0 0
    %886 = vmatpush1.bf16.msra.mxu0 0
    %887 = vmatprep.subr.bf16.mxu0 0
    %888 = vmatpush1.bf16.msra.mxu0 0
    %889 = vmatprep.subr.bf16.mxu0 0
    %890 = vmatpush1.bf16.msra.mxu0 0
    %891 = vmatprep.subr.bf16.mxu0 0
    %892 = vmatpush1.bf16.msra.mxu0 0
    %893 = vmatprep.subr.bf16.mxu0 0
    %894 = vmatpush1.bf16.msra.mxu0 0
    %895 = vmatprep.subr.bf16.mxu0 0
    %896 = vmatpush1.bf16.msra.mxu0 0
    %897 = vmatprep.subr.bf16.mxu0 0
    %898 = vmatpush1.bf16.msra.mxu0 0
    %899 = vmatprep.subr.bf16.mxu0 0
    %900 = vmatpush1.bf16.msra.mxu0 0
    %901 = vmatprep.subr.bf16.mxu0 0
    %902 = vmatpush1.bf16.msra.mxu0 0
    %903 = vmatprep.subr.bf16.mxu0 0
    %904 = vmatpush1.bf16.msra.mxu0 0
    %905 = vmatprep.mubr.bf16.mxu0 0
    %906 = vmatmul.mubr.bf16.gmra.mrb[0].mxu0 %v666
    %v907 = vpop.f32.mrb[0].mxu0
    %v908 = vadd.f32 %v176, %v907
    %v909 = vpop.f32.mrb[0].mxu0
    %v910 = vadd.f32 %v180, %v909
    %v911 = vpop.f32.mrb[0].mxu0
    %v912 = vpop.f32.mrb[0].mxu0
    %913 = vdwg.mxu0
    %914 = vmatprep.subr.bf16.mxu0 %v497
    %915 = vmatpush1.bf16.msra.mxu0 %v496
    %916 = vmatprep.subr.bf16.mxu0 %v512
    %917 = vmatpush1.bf16.msra.mxu0 %v511
    %918 = vmatprep.subr.bf16.mxu0 %v527
    %919 = vmatpush1.bf16.msra.mxu0 %v526
    %920 = vmatprep.subr.bf16.mxu0 %v542
    %921 = vmatpush1.bf16.msra.mxu0 %v541
    %922 = vmatprep.subr.bf16.mxu0 %v557
    %923 = vmatpush1.bf16.msra.mxu0 %v556
    %924 = vmatprep.subr.bf16.mxu0 %v572
    %925 = vmatpush1.bf16.msra.mxu0 %v571
    %926 = vmatprep.subr.bf16.mxu0 0
    %927 = vmatpush1.bf16.msra.mxu0 0
    %928 = vmatprep.subr.bf16.mxu0 0
    %929 = vmatpush1.bf16.msra.mxu0 0
    %930 = vmatprep.subr.bf16.mxu0 0
    %931 = vmatpush1.bf16.msra.mxu0 0
    %932 = vmatprep.subr.bf16.mxu0 0
    %933 = vmatpush1.bf16.msra.mxu0 0
    %934 = vmatprep.subr.bf16.mxu0 0
    %935 = vmatpush1.bf16.msra.mxu0 0
    %936 = vmatprep.subr.bf16.mxu0 0
    %937 = vmatpush1.bf16.msra.mxu0 0
    %938 = vmatprep.subr.bf16.mxu0 0
    %939 = vmatpush1.bf16.msra.mxu0 0
    %940 = vmatprep.subr.bf16.mxu0 0
    %941 = vmatpush1.bf16.msra.mxu0 0
    %942 = vmatprep.subr.bf16.mxu0 0
    %943 = vmatpush1.bf16.msra.mxu0 0
    %944 = vmatprep.subr.bf16.mxu0 0
    %945 = vmatpush1.bf16.msra.mxu0 0
    %946 = vmatprep.mubr.bf16.mxu0 0
    %947 = vmatmul.mubr.bf16.gmra.mrb[0].mxu0 %v666
    %v948 = vpop.f32.mrb[0].mxu0
    %v949 = vadd.f32 %v184, %v948
    %v950 = vpop.f32.mrb[0].mxu0
    %v951 = vadd.f32 %v188, %v950
    %v952 = vpop.f32.mrb[0].mxu0
    %v953 = vpop.f32.mrb[0].mxu0
    %954 = vdwg.mxu0
    %955 = vmatprep.subr.bf16.mxu0 0
    %956 = vmatpush1.bf16.msra.mxu0 %v498
    %957 = vmatprep.subr.bf16.mxu0 0
    %958 = vmatpush1.bf16.msra.mxu0 %v513
    %959 = vmatprep.subr.bf16.mxu0 0
    %960 = vmatpush1.bf16.msra.mxu0 %v528
    %961 = vmatprep.subr.bf16.mxu0 0
    %962 = vmatpush1.bf16.msra.mxu0 %v543
    %963 = vmatprep.subr.bf16.mxu0 0
    %964 = vmatpush1.bf16.msra.mxu0 %v558
    %965 = vmatprep.subr.bf16.mxu0 0
    %966 = vmatpush1.bf16.msra.mxu0 %v573
    %967 = vmatprep.subr.bf16.mxu0 0
    %968 = vmatpush1.bf16.msra.mxu0 0
    %969 = vmatprep.subr.bf16.mxu0 0
    %970 = vmatpush1.bf16.msra.mxu0 0
    %971 = vmatprep.subr.bf16.mxu0 0
    %972 = vmatpush1.bf16.msra.mxu0 0
    %973 = vmatprep.subr.bf16.mxu0 0
    %974 = vmatpush1.bf16.msra.mxu0 0
    %975 = vmatprep.subr.bf16.mxu0 0
    %976 = vmatpush1.bf16.msra.mxu0 0
    %977 = vmatprep.subr.bf16.mxu0 0
    %978 = vmatpush1.bf16.msra.mxu0 0
    %979 = vmatprep.subr.bf16.mxu0 0
    %980 = vmatpush1.bf16.msra.mxu0 0
    %981 = vmatprep.subr.bf16.mxu0 0
    %982 = vmatpush1.bf16.msra.mxu0 0
    %983 = vmatprep.subr.bf16.mxu0 0
    %984 = vmatpush1.bf16.msra.mxu0 0
    %985 = vmatprep.subr.bf16.mxu0 0
    %986 = vmatpush1.bf16.msra.mxu0 0
    %987 = vmatprep.mubr.bf16.mxu0 0
    %988 = vmatmul.mubr.bf16.gmra.mrb[0].mxu0 %v666
    %v989 = vpop.f32.mrb[0].mxu0
    %v990 = vadd.f32 %v192, %v989
    %v991 = vpop.f32.mrb[0].mxu0
    %v992 = vpop.f32.mrb[0].mxu0
    %v993 = vpop.f32.mrb[0].mxu0
    %994 = vdwg.mxu0
    %v995 = vmax.f32 %v703, 0.0
    %v996 = vmax.f32 %v705, 0.0
    %v997 = vmax.f32 %v744, 0.0
    %v998 = vmax.f32 %v746, 0.0
    %v999 = vmax.f32 %v785, 0.0
    %v1000 = vmax.f32 %v787, 0.0
    %v1001 = vmax.f32 %v826, 0.0
    %v1002 = vmax.f32 %v828, 0.0
    %v1003 = vmax.f32 %v867, 0.0
    %v1004 = vmax.f32 %v869, 0.0
    %v1005 = vmax.f32 %v908, 0.0
    %v1006 = vmax.f32 %v910, 0.0
    %v1007 = vmax.f32 %v949, 0.0
    %v1008 = vmax.f32 %v951, 0.0
    %v1009 = vmax.f32 %v990, 0.0
    %v1010 = vpack.c.bf16 %v995, %v995
    %v1011 = vpack.c.bf16 %v996, %v996
    %v1012 = vpack.c.bf16 %v997, %v997
    %v1013 = vpack.c.bf16 %v998, %v998
    %v1014 = vpack.c.bf16 %v999, %v999
    %v1015 = vpack.c.bf16 %v1000, %v1000
    %v1016 = vpack.c.bf16 %v1001, %v1001
    %v1017 = vpack.c.bf16 %v1002, %v1002
    %v1018 = vpack.c.bf16 %v1003, %v1003
    %v1019 = vpack.c.bf16 %v1004, %v1004
    %v1020 = vpack.c.bf16 %v1005, %v1005
    %v1021 = vpack.c.bf16 %v1006, %v1006
    %v1022 = vpack.c.bf16 %v1007, %v1007
    %v1023 = vpack.c.bf16 %v1008, %v1008
    %v1024 = vpack.c.bf16 %v1009, %v1009
    %v1025 = vld [vmem:[%s4] sm:$0xf]
    %v1026 = vld [vmem:[%s4 + $0x4] sm:$0xf]
    %v1027 = vld [vmem:[%s4 + $0x8] sm:$0xf]
    %v1028 = vld [vmem:[%s4 + $0xc] sm:$0xf]
    %v1029 = vld [vmem:[%s4 + $0x10] sm:$0xf]
    %v1030 = vld [vmem:[%s4 + $0x14] sm:$0xf]
    %v1031 = vld [vmem:[%s4 + $0x18] sm:$0xf]
    %v1032 = vld [vmem:[%s4 + $0x1c] sm:$0xf]
    %v1033 = vld [vmem:[%s4 + $0x20] sm:$0xf]
    %v1034 = vld [vmem:[%s4 + $0x24] sm:$0xf]
    %v1035 = vld [vmem:[%s4 + $0x28] sm:$0xf]
    %v1036 = vld [vmem:[%s4 + $0x2c] sm:$0xf]
    %v1037 = vld [vmem:[%s4 + $0x30] sm:$0xf]
    %v1038 = vld [vmem:[%s4 + $0x34] sm:$0xf]
    %v1039 = vld [vmem:[%s4 + $0x38] sm:$0xf]
    %v1040 = vld [vmem:[%s4 + $0x3c] sm:$0xf]
    %v1041 = vld [vmem:[%s4 + $0x40] sm:$0xf]
    %v1042 = vld [vmem:[%s4 + $0x44] sm:$0xf]
    %v1043 = vld [vmem:[%s4 + $0x48] sm:$0xf]
    %v1044 = vld [vmem:[%s4 + $0x4c] sm:$0xf]
    %v1045 = vld [vmem:[%s4 + $0x50] sm:$0xf]
    %v1046 = vld [vmem:[%s4 + $0x54] sm:$0xf]
    %v1047 = vld [vmem:[%s4 + $0x58] sm:$0xf]
    %v1048 = vld [vmem:[%s4 + $0x5c] sm:$0xf]
    %v1049 = vld [vmem:[%s4 + $0x60] sm:$0xf]
    %v1050 = vld [vmem:[%s4 + $0x64] sm:$0xf]
    %v1051 = vld [vmem:[%s4 + $0x68] sm:$0xf]
    %v1052 = vld [vmem:[%s4 + $0x6c] sm:$0xf]
    %v1053 = vld [vmem:[%s4 + $0x70] sm:$0xf]
    %v1054 = vld [vmem:[%s4 + $0x74] sm:$0xf]
    %v1055 = vld [vmem:[%s4 + $0x78] sm:$0xf]
    %v1056 = vld [vmem:[%s4 + $0x7c] sm:$0xf]
    %v1057 = vld [vmem:[%s4 + $0x80] sm:$0xf]
    %v1058 = vld [vmem:[%s4 + $0x84] sm:$0xf]
    %v1059 = vld [vmem:[%s4 + $0x88] sm:$0xf]
    %v1060 = vld [vmem:[%s4 + $0x8c] sm:$0xf]
    %v1061 = vld [vmem:[%s4 + $0x90] sm:$0xf]
    %v1062 = vld [vmem:[%s4 + $0x94] sm:$0xf]
    %v1063 = vld [vmem:[%s4 + $0x98] sm:$0xf]
    %v1064 = vld [vmem:[%s4 + $0x9c] sm:$0xf]
    %v1065 = vld [vmem:[%s4 + $0xa0] sm:$0xf]
    %v1066 = vld [vmem:[%s4 + $0xa4] sm:$0xf]
    %v1067 = vld [vmem:[%s4 + $0xa8] sm:$0xf]
    %v1068 = vld [vmem:[%s4 + $0xac] sm:$0xf]
    %v1069 = vld [vmem:[%s4 + $0xb0] sm:$0xf]
    %v1070 = vld [vmem:[%s4 + $0xb4] sm:$0xf]
    %v1071 = vld [vmem:[%s4 + $0xb8] sm:$0xf]
    %v1072 = vld [vmem:[%s4 + $0xbc] sm:$0xf]
    %v1073 = vld [vmem:[%s4 + $0xc0] sm:$0xf]
    %v1074 = vld [vmem:[%s4 + $0xc4] sm:$0xf]
    %v1075 = vld [vmem:[%s4 + $0xc8] sm:$0xf]
    %v1076 = vld [vmem:[%s4 + $0xcc] sm:$0xf]
    %v1077 = vld [vmem:[%s4 + $0xd0] sm:$0xf]
    %v1078 = vld [vmem:[%s4 + $0xd4] sm:$0xf]
    %v1079 = vld [vmem:[%s4 + $0xd8] sm:$0xf]
    %v1080 = vld [vmem:[%s4 + $0xdc] sm:$0xf]
    %v1081 = vld [vmem:[%s4 + $0xe0] sm:$0xf]
    %v1082 = vld [vmem:[%s4 + $0xe4] sm:$0xf]
    %v1083 = vld [vmem:[%s4 + $0xe8] sm:$0xf]
    %v1084 = vld [vmem:[%s4 + $0xec] sm:$0xf]
    %v1085 = vld [vmem:[%s4 + $0xf0] sm:$0xf]
    %v1086 = vld [vmem:[%s4 + $0xf4] sm:$0xf]
    %v1087 = vld [vmem:[%s4 + $0xf8] sm:$0xf]
    %v1088 = vld [vmem:[%s4 + $0xfc] sm:$0xf]
    %v1089 = vld [vmem:[%s4 + $0x100] sm:$0xf]
    %v1090 = vld [vmem:[%s4 + $0x104] sm:$0xf]
    %v1091 = vld [vmem:[%s4 + $0x108] sm:$0xf]
    %v1092 = vld [vmem:[%s4 + $0x10c] sm:$0xf]
    %v1093 = vld [vmem:[%s4 + $0x110] sm:$0xf]
    %v1094 = vld [vmem:[%s4 + $0x114] sm:$0xf]
    %v1095 = vld [vmem:[%s4 + $0x118] sm:$0xf]
    %v1096 = vld [vmem:[%s4 + $0x11c] sm:$0xf]
    %v1097 = vld [vmem:[%s4 + $0x120] sm:$0xf]
    %v1098 = vld [vmem:[%s4 + $0x124] sm:$0xf]
    %v1099 = vld [vmem:[%s4 + $0x128] sm:$0xf]
    %v1100 = vld [vmem:[%s4 + $0x12c] sm:$0xf]
    %v1101 = vld [vmem:[%s4 + $0x130] sm:$0xf]
    %v1102 = vld [vmem:[%s4 + $0x134] sm:$0xf]
    %v1103 = vld [vmem:[%s4 + $0x138] sm:$0xf]
    %v1104 = vld [vmem:[%s4 + $0x13c] sm:$0xf]
    %v1105 = vld [vmem:[%s4 + $0x140] sm:$0xf]
    %v1106 = vld [vmem:[%s4 + $0x144] sm:$0xf]
    %v1107 = vld [vmem:[%s4 + $0x148] sm:$0xf]
    %v1108 = vld [vmem:[%s4 + $0x14c] sm:$0xf]
    %v1109 = vld [vmem:[%s4 + $0x150] sm:$0xf]
    %v1110 = vld [vmem:[%s4 + $0x154] sm:$0xf]
    %v1111 = vld [vmem:[%s4 + $0x158] sm:$0xf]
    %v1112 = vld [vmem:[%s4 + $0x15c] sm:$0xf]
    %v1113 = vld [vmem:[%s4 + $0x160] sm:$0xf]
    %v1114 = vld [vmem:[%s4 + $0x164] sm:$0xf]
    %v1115 = vld [vmem:[%s4 + $0x168] sm:$0xf]
    %v1116 = vld [vmem:[%s4 + $0x16c] sm:$0xf]
    %v1117 = vld [vmem:[%s4 + $0x170] sm:$0xf]
    %v1118 = vld [vmem:[%s4 + $0x174] sm:$0xf]
    %v1119 = vld [vmem:[%s4 + $0x178] sm:$0xf]
    %v1120 = vld [vmem:[%s4 + $0x17c] sm:$0xf]
    %v1121 = vld [vmem:[%s4 + $0x180] sm:$0xf]
    %v1122 = vld [vmem:[%s4 + $0x184] sm:$0xf]
    %v1123 = vld [vmem:[%s4 + $0x188] sm:$0xf]
    %v1124 = vld [vmem:[%s4 + $0x18c] sm:$0xf]
    %v1125 = vld [vmem:[%s4 + $0x190] sm:$0xf]
    %v1126 = vld [vmem:[%s4 + $0x194] sm:$0xf]
    %v1127 = vld [vmem:[%s4 + $0x198] sm:$0xf]
    %v1128 = vld [vmem:[%s4 + $0x19c] sm:$0xf]
    %v1129 = vld [vmem:[%s4 + $0x1a0] sm:$0xf]
    %v1130 = vld [vmem:[%s4 + $0x1a4] sm:$0xf]
    %v1131 = vld [vmem:[%s4 + $0x1a8] sm:$0xf]
    %v1132 = vld [vmem:[%s4 + $0x1ac] sm:$0xf]
    %v1133 = vld [vmem:[%s4 + $0x1b0] sm:$0xf]
    %v1134 = vld [vmem:[%s4 + $0x1b4] sm:$0xf]
    %v1135 = vld [vmem:[%s4 + $0x1b8] sm:$0xf]
    %v1136 = vld [vmem:[%s4 + $0x1bc] sm:$0xf]
    %v1137 = vld [vmem:[%s4 + $0x1c0] sm:$0xf]
    %v1138 = vld [vmem:[%s4 + $0x1c4] sm:$0xf]
    %v1139 = vld [vmem:[%s4 + $0x1c8] sm:$0xf]
    %v1140 = vld [vmem:[%s4 + $0x1cc] sm:$0xf]
    %v1141 = vld [vmem:[%s4 + $0x1d0] sm:$0xf]
    %v1142 = vld [vmem:[%s4 + $0x1d4] sm:$0xf]
    %v1143 = vld [vmem:[%s4 + $0x1d8] sm:$0xf]
    %v1144 = vld [vmem:[%s4 + $0x1dc] sm:$0xf]
    %v1145 = vld [vmem:[%s4 + $0x1e0] sm:$0xf]
    %v1146 = vld [vmem:[%s4 + $0x1e4] sm:$0xf]
    %v1147 = vld [vmem:[%s4 + $0x1e8] sm:$0xf]
    %v1148 = vld [vmem:[%s4 + $0x1ec] sm:$0xf]
    %v1149 = vld [vmem:[%s4 + $0x1f0] sm:$0xf]
    %v1150 = vld [vmem:[%s4 + $0x1f4] sm:$0xf]
    %v1151 = vld [vmem:[%s4 + $0x1f8] sm:$0xf]
    %v1152 = vld [vmem:[%s4 + $0x1fc] sm:$0xf]
    %v1153 = vld [vmem:[%s4 + $0x200] sm:$0xf]
    %v1154 = vld [vmem:[%s4 + $0x204] sm:$0xf]
    %v1155 = vld [vmem:[%s4 + $0x208] sm:$0xf]
    %v1156 = vld [vmem:[%s4 + $0x20c] sm:$0xf]
    %v1157 = vld [vmem:[%s4 + $0x210] sm:$0xf]
    %v1158 = vld [vmem:[%s4 + $0x214] sm:$0xf]
    %v1159 = vld [vmem:[%s4 + $0x218] sm:$0xf]
    %v1160 = vld [vmem:[%s4 + $0x21c] sm:$0xf]
    %v1161 = vld [vmem:[%s4 + $0x220] sm:$0xf]
    %v1162 = vld [vmem:[%s4 + $0x224] sm:$0xf]
    %v1163 = vld [vmem:[%s4 + $0x228] sm:$0xf]
    %v1164 = vld [vmem:[%s4 + $0x22c] sm:$0xf]
    %v1165 = vld [vmem:[%s4 + $0x230] sm:$0xf]
    %v1166 = vld [vmem:[%s4 + $0x234] sm:$0xf]
    %v1167 = vld [vmem:[%s4 + $0x238] sm:$0xf]
    %v1168 = vld [vmem:[%s4 + $0x23c] sm:$0xf]
    %v1169 = vld [vmem:[%s4 + $0x240] sm:$0xf]
    %v1170 = vld [vmem:[%s4 + $0x244] sm:$0xf]
    %v1171 = vld [vmem:[%s4 + $0x248] sm:$0xf]
    %v1172 = vld [vmem:[%s4 + $0x24c] sm:$0xf]
    %v1173 = vld [vmem:[%s4 + $0x250] sm:$0xf]
    %v1174 = vld [vmem:[%s4 + $0x254] sm:$0xf]
    %v1175 = vld [vmem:[%s4 + $0x258] sm:$0xf]
    %v1176 = vld [vmem:[%s4 + $0x25c] sm:$0xf]
    %v1177 = vld [vmem:[%s4 + $0x260] sm:$0xf]
    %v1178 = vld [vmem:[%s4 + $0x264] sm:$0xf]
    %v1179 = vld [vmem:[%s4 + $0x268] sm:$0xf]
    %v1180 = vld [vmem:[%s4 + $0x26c] sm:$0xf]
    %v1181 = vld [vmem:[%s4 + $0x270] sm:$0xf]
    %v1182 = vld [vmem:[%s4 + $0x274] sm:$0xf]
    %v1183 = vld [vmem:[%s4 + $0x278] sm:$0xf]
    %v1184 = vld [vmem:[%s4 + $0x27c] sm:$0xf]
    %v1185 = vld [vmem:[%s4 + $0x280] sm:$0xf]
    %v1186 = vld [vmem:[%s4 + $0x284] sm:$0xf]
    %v1187 = vld [vmem:[%s4 + $0x288] sm:$0xf]
    %v1188 = vld [vmem:[%s4 + $0x28c] sm:$0xf]
    %v1189 = vld [vmem:[%s4 + $0x290] sm:$0xf]
    %v1190 = vld [vmem:[%s4 + $0x294] sm:$0xf]
    %v1191 = vld [vmem:[%s4 + $0x298] sm:$0xf]
    %v1192 = vld [vmem:[%s4 + $0x29c] sm:$0xf]
    %v1193 = vld [vmem:[%s4 + $0x2a0] sm:$0xf]
    %v1194 = vld [vmem:[%s4 + $0x2a4] sm:$0xf]
    %v1195 = vld [vmem:[%s4 + $0x2a8] sm:$0xf]
    %v1196 = vld [vmem:[%s4 + $0x2ac] sm:$0xf]
    %v1197 = vld [vmem:[%s4 + $0x2b0] sm:$0xf]
    %v1198 = vld [vmem:[%s4 + $0x2b4] sm:$0xf]
    %v1199 = vld [vmem:[%s4 + $0x2b8] sm:$0xf]
    %v1200 = vld [vmem:[%s4 + $0x2bc] sm:$0xf]
    %v1201 = vld [vmem:[%s4 + $0x2c0] sm:$0xf]
    %v1202 = vld [vmem:[%s4 + $0x2c4] sm:$0xf]
    %v1203 = vld [vmem:[%s4 + $0x2c8] sm:$0xf]
    %v1204 = vld [vmem:[%s4 + $0x2cc] sm:$0xf]
    %v1205 = vld [vmem:[%s4 + $0x2d0] sm:$0xf]
    %v1206 = vld [vmem:[%s4 + $0x2d4] sm:$0xf]
    %v1207 = vld [vmem:[%s4 + $0x2d8] sm:$0xf]
    %v1208 = vld [vmem:[%s4 + $0x2dc] sm:$0xf]
    %v1209 = vld [vmem:[%s4 + $0x2e0] sm:$0xf]
    %v1210 = vld [vmem:[%s4 + $0x2e4] sm:$0xf]
    %v1211 = vld [vmem:[%s4 + $0x2e8] sm:$0xf]
    %v1212 = vld [vmem:[%s4 + $0x2ec] sm:$0xf]
    %v1213 = vld [vmem:[%s4 + $0x2f0] sm:$0xf]
    %v1214 = vld [vmem:[%s4 + $0x2f4] sm:$0xf]
    %v1215 = vld [vmem:[%s4 + $0x2f8] sm:$0xf]
    %v1216 = vld [vmem:[%s4 + $0x2fc] sm:$0xf]
    %v1217 = vld [vmem:[%s4 + $0x300] sm:$0xf]
    %v1218 = vld [vmem:[%s4 + $0x304] sm:$0xf]
    %v1219 = vld [vmem:[%s4 + $0x308] sm:$0xf]
    %v1220 = vld [vmem:[%s4 + $0x30c] sm:$0xf]
    %v1221 = vld [vmem:[%s4 + $0x310] sm:$0xf]
    %v1222 = vld [vmem:[%s4 + $0x314] sm:$0xf]
    %v1223 = vld [vmem:[%s4 + $0x318] sm:$0xf]
    %v1224 = vld [vmem:[%s4 + $0x31c] sm:$0xf]
    %v1225 = vld [vmem:[%s4 + $0x320] sm:$0xf]
    %v1226 = vld [vmem:[%s4 + $0x324] sm:$0xf]
    %v1227 = vld [vmem:[%s4 + $0x328] sm:$0xf]
    %v1228 = vld [vmem:[%s4 + $0x32c] sm:$0xf]
    %v1229 = vld [vmem:[%s4 + $0x330] sm:$0xf]
    %v1230 = vld [vmem:[%s4 + $0x334] sm:$0xf]
    %v1231 = vld [vmem:[%s4 + $0x338] sm:$0xf]
    %v1232 = vld [vmem:[%s4 + $0x33c] sm:$0xf]
    %v1233 = vld [vmem:[%s4 + $0x340] sm:$0xf]
    %v1234 = vld [vmem:[%s4 + $0x344] sm:$0xf]
    %v1235 = vld [vmem:[%s4 + $0x348] sm:$0xf]
    %v1236 = vld [vmem:[%s4 + $0x34c] sm:$0xf]
    %v1237 = vld [vmem:[%s4 + $0x350] sm:$0xf]
    %v1238 = vld [vmem:[%s4 + $0x354] sm:$0xf]
    %v1239 = vld [vmem:[%s4 + $0x358] sm:$0xf]
    %v1240 = vld [vmem:[%s4 + $0x35c] sm:$0xf]
    %v1241 = vld [vmem:[%s4 + $0x360] sm:$0xf]
    %v1242 = vld [vmem:[%s4 + $0x364] sm:$0xf]
    %v1243 = vld [vmem:[%s4 + $0x368] sm:$0xf]
    %v1244 = vld [vmem:[%s4 + $0x36c] sm:$0xf]
    %v1245 = vld [vmem:[%s4 + $0x370] sm:$0xf]
    %v1246 = vld [vmem:[%s4 + $0x374] sm:$0xf]
    %v1247 = vld [vmem:[%s4 + $0x378] sm:$0xf]
    %v1248 = vld [vmem:[%s4 + $0x37c] sm:$0xf]
    %v1249 = vld [vmem:[%s4 + $0x380] sm:$0xf]
    %v1250 = vld [vmem:[%s4 + $0x384] sm:$0xf]
    %v1251 = vld [vmem:[%s4 + $0x388] sm:$0xf]
    %v1252 = vld [vmem:[%s4 + $0x38c] sm:$0xf]
    %v1253 = vld [vmem:[%s4 + $0x390] sm:$0xf]
    %v1254 = vld [vmem:[%s4 + $0x394] sm:$0xf]
    %v1255 = vld [vmem:[%s4 + $0x398] sm:$0xf]
    %v1256 = vld [vmem:[%s4 + $0x39c] sm:$0xf]
    %v1257 = vld [vmem:[%s4 + $0x3a0] sm:$0xf]
    %v1258 = vld [vmem:[%s4 + $0x3a4] sm:$0xf]
    %v1259 = vld [vmem:[%s4 + $0x3a8] sm:$0xf]
    %v1260 = vld [vmem:[%s4 + $0x3ac] sm:$0xf]
    %v1261 = vld [vmem:[%s4 + $0x3b0] sm:$0xf]
    %v1262 = vld [vmem:[%s4 + $0x3b4] sm:$0xf]
    %v1263 = vld [vmem:[%s4 + $0x3b8] sm:$0xf]
    %v1264 = vld [vmem:[%s4 + $0x3bc] sm:$0xf]
    %v1265 = vld [vmem:[%s5] sm:$0x1]
    %v1267 = vlaneseq
    %v1268 = vshrl.u32 %v1267, 7
    %v1269 = vsub.s32 0, %v1268
    %v1270 = vrot.slane %v1265, %v1269
    %v1512 = vunpack.c.l.b16 %v1025
    %v1513 = vunpack.c.l.b16 %v1026
    %v1514 = vunpack.c.l.b16 %v1027
    %v1515 = vunpack.c.l.b16 %v1028
    %v1516 = vunpack.c.l.b16 %v1029
    %v1517 = vunpack.c.l.b16 %v1030
    %v1518 = vunpack.c.l.b16 %v1031
    %v1519 = vunpack.c.l.b16 %v1032
    %v1520 = vunpack.c.l.b16 %v1033
    %v1521 = vunpack.c.l.b16 %v1034
    %v1522 = vunpack.c.l.b16 %v1035
    %v1523 = vunpack.c.l.b16 %v1036
    %v1524 = vunpack.c.l.b16 %v1037
    %v1525 = vunpack.c.l.b16 %v1038
    %v1526 = vunpack.c.l.b16 %v1039
    %v1527 = vunpack.c.l.b16 %v1040
    %v1528 = vunpack.c.l.b16 %v1041
    %v1529 = vunpack.c.l.b16 %v1042
    %v1530 = vunpack.c.l.b16 %v1043
    %v1531 = vunpack.c.l.b16 %v1044
    %v1532 = vunpack.c.l.b16 %v1045
    %v1533 = vunpack.c.l.b16 %v1046
    %v1534 = vunpack.c.l.b16 %v1047
    %v1535 = vunpack.c.l.b16 %v1048
    %v1536 = vunpack.c.l.b16 %v1049
    %v1537 = vunpack.c.l.b16 %v1050
    %v1538 = vunpack.c.l.b16 %v1051
    %v1539 = vunpack.c.l.b16 %v1052
    %v1540 = vunpack.c.l.b16 %v1053
    %v1541 = vunpack.c.l.b16 %v1054
    %v1542 = vunpack.c.l.b16 %v1055
    %v1543 = vunpack.c.l.b16 %v1056
    %v1544 = vunpack.c.l.b16 %v1057
    %v1545 = vunpack.c.l.b16 %v1058
    %v1546 = vunpack.c.l.b16 %v1059
    %v1547 = vunpack.c.l.b16 %v1060
    %v1548 = vunpack.c.l.b16 %v1061
    %v1549 = vunpack.c.l.b16 %v1062
    %v1550 = vunpack.c.l.b16 %v1063
    %v1551 = vunpack.c.l.b16 %v1064
    %v1552 = vunpack.c.l.b16 %v1065
    %v1553 = vunpack.c.l.b16 %v1066
    %v1554 = vunpack.c.l.b16 %v1067
    %v1555 = vunpack.c.l.b16 %v1068
    %v1556 = vunpack.c.l.b16 %v1069
    %v1557 = vunpack.c.l.b16 %v1070
    %v1558 = vunpack.c.l.b16 %v1071
    %v1559 = vunpack.c.l.b16 %v1072
    %v1560 = vunpack.c.l.b16 %v1073
    %v1561 = vunpack.c.l.b16 %v1074
    %v1562 = vunpack.c.l.b16 %v1075
    %v1563 = vunpack.c.l.b16 %v1076
    %v1564 = vunpack.c.l.b16 %v1077
    %v1565 = vunpack.c.l.b16 %v1078
    %v1566 = vunpack.c.l.b16 %v1079
    %v1567 = vunpack.c.l.b16 %v1080
    %v1568 = vunpack.c.l.b16 %v1081
    %v1569 = vunpack.c.l.b16 %v1082
    %v1570 = vunpack.c.l.b16 %v1083
    %v1571 = vunpack.c.l.b16 %v1084
    %v1572 = vunpack.c.l.b16 %v1085
    %v1573 = vunpack.c.l.b16 %v1086
    %v1574 = vunpack.c.l.b16 %v1087
    %v1575 = vunpack.c.l.b16 %v1088
    %v1576 = vunpack.c.l.b16 %v1089
    %v1577 = vunpack.c.l.b16 %v1090
    %v1578 = vunpack.c.l.b16 %v1091
    %v1579 = vunpack.c.l.b16 %v1092
    %v1580 = vunpack.c.l.b16 %v1093
    %v1581 = vunpack.c.l.b16 %v1094
    %v1582 = vunpack.c.l.b16 %v1095
    %v1583 = vunpack.c.l.b16 %v1096
    %v1584 = vunpack.c.l.b16 %v1097
    %v1585 = vunpack.c.l.b16 %v1098
    %v1586 = vunpack.c.l.b16 %v1099
    %v1587 = vunpack.c.l.b16 %v1100
    %v1588 = vunpack.c.l.b16 %v1101
    %v1589 = vunpack.c.l.b16 %v1102
    %v1590 = vunpack.c.l.b16 %v1103
    %v1591 = vunpack.c.l.b16 %v1104
    %v1592 = vunpack.c.l.b16 %v1105
    %v1593 = vunpack.c.l.b16 %v1106
    %v1594 = vunpack.c.l.b16 %v1107
    %v1595 = vunpack.c.l.b16 %v1108
    %v1596 = vunpack.c.l.b16 %v1109
    %v1597 = vunpack.c.l.b16 %v1110
    %v1598 = vunpack.c.l.b16 %v1111
    %v1599 = vunpack.c.l.b16 %v1112
    %v1600 = vunpack.c.l.b16 %v1113
    %v1601 = vunpack.c.l.b16 %v1114
    %v1602 = vunpack.c.l.b16 %v1115
    %v1603 = vunpack.c.l.b16 %v1116
    %v1604 = vunpack.c.l.b16 %v1117
    %v1605 = vunpack.c.l.b16 %v1118
    %v1606 = vunpack.c.l.b16 %v1119
    %v1607 = vunpack.c.l.b16 %v1120
    %v1608 = vunpack.c.l.b16 %v1121
    %v1609 = vunpack.c.l.b16 %v1122
    %v1610 = vunpack.c.l.b16 %v1123
    %v1611 = vunpack.c.l.b16 %v1124
    %v1612 = vunpack.c.l.b16 %v1125
    %v1613 = vunpack.c.l.b16 %v1126
    %v1614 = vunpack.c.l.b16 %v1127
    %v1615 = vunpack.c.l.b16 %v1128
    %v1616 = vunpack.c.l.b16 %v1129
    %v1617 = vunpack.c.l.b16 %v1130
    %v1618 = vunpack.c.l.b16 %v1131
    %v1619 = vunpack.c.l.b16 %v1132
    %v1620 = vunpack.c.l.b16 %v1133
    %v1621 = vunpack.c.l.b16 %v1134
    %v1622 = vunpack.c.l.b16 %v1135
    %v1623 = vunpack.c.l.b16 %v1136
    %v1624 = vunpack.c.l.b16 %v1137
    %v1625 = vunpack.c.l.b16 %v1138
    %v1626 = vunpack.c.l.b16 %v1139
    %v1627 = vunpack.c.l.b16 %v1140
    %v1628 = vunpack.c.l.b16 %v1141
    %v1629 = vunpack.c.l.b16 %v1142
    %v1630 = vunpack.c.l.b16 %v1143
    %v1631 = vunpack.c.l.b16 %v1144
    %v1632 = vunpack.c.l.b16 %v1145
    %v1633 = vunpack.c.l.b16 %v1146
    %v1634 = vunpack.c.l.b16 %v1147
    %v1635 = vunpack.c.l.b16 %v1148
    %v1636 = vunpack.c.l.b16 %v1149
    %v1637 = vunpack.c.l.b16 %v1150
    %v1638 = vunpack.c.l.b16 %v1151
    %v1639 = vunpack.c.l.b16 %v1152
    %v1640 = vunpack.c.l.b16 %v1153
    %v1641 = vunpack.c.l.b16 %v1154
    %v1642 = vunpack.c.l.b16 %v1155
    %v1643 = vunpack.c.l.b16 %v1156
    %v1644 = vunpack.c.l.b16 %v1157
    %v1645 = vunpack.c.l.b16 %v1158
    %v1646 = vunpack.c.l.b16 %v1159
    %v1647 = vunpack.c.l.b16 %v1160
    %v1648 = vunpack.c.l.b16 %v1161
    %v1649 = vunpack.c.l.b16 %v1162
    %v1650 = vunpack.c.l.b16 %v1163
    %v1651 = vunpack.c.l.b16 %v1164
    %v1652 = vunpack.c.l.b16 %v1165
    %v1653 = vunpack.c.l.b16 %v1166
    %v1654 = vunpack.c.l.b16 %v1167
    %v1655 = vunpack.c.l.b16 %v1168
    %v1656 = vunpack.c.l.b16 %v1169
    %v1657 = vunpack.c.l.b16 %v1170
    %v1658 = vunpack.c.l.b16 %v1171
    %v1659 = vunpack.c.l.b16 %v1172
    %v1660 = vunpack.c.l.b16 %v1173
    %v1661 = vunpack.c.l.b16 %v1174
    %v1662 = vunpack.c.l.b16 %v1175
    %v1663 = vunpack.c.l.b16 %v1176
    %v1664 = vunpack.c.l.b16 %v1177
    %v1665 = vunpack.c.l.b16 %v1178
    %v1666 = vunpack.c.l.b16 %v1179
    %v1667 = vunpack.c.l.b16 %v1180
    %v1668 = vunpack.c.l.b16 %v1181
    %v1669 = vunpack.c.l.b16 %v1182
    %v1670 = vunpack.c.l.b16 %v1183
    %v1671 = vunpack.c.l.b16 %v1184
    %v1672 = vunpack.c.l.b16 %v1185
    %v1673 = vunpack.c.l.b16 %v1186
    %v1674 = vunpack.c.l.b16 %v1187
    %v1675 = vunpack.c.l.b16 %v1188
    %v1676 = vunpack.c.l.b16 %v1189
    %v1677 = vunpack.c.l.b16 %v1190
    %v1678 = vunpack.c.l.b16 %v1191
    %v1679 = vunpack.c.l.b16 %v1192
    %v1680 = vunpack.c.l.b16 %v1193
    %v1681 = vunpack.c.l.b16 %v1194
    %v1682 = vunpack.c.l.b16 %v1195
    %v1683 = vunpack.c.l.b16 %v1196
    %v1684 = vunpack.c.l.b16 %v1197
    %v1685 = vunpack.c.l.b16 %v1198
    %v1686 = vunpack.c.l.b16 %v1199
    %v1687 = vunpack.c.l.b16 %v1200
    %v1688 = vunpack.c.l.b16 %v1201
    %v1689 = vunpack.c.l.b16 %v1202
    %v1690 = vunpack.c.l.b16 %v1203
    %v1691 = vunpack.c.l.b16 %v1204
    %v1692 = vunpack.c.l.b16 %v1205
    %v1693 = vunpack.c.l.b16 %v1206
    %v1694 = vunpack.c.l.b16 %v1207
    %v1695 = vunpack.c.l.b16 %v1208
    %v1696 = vunpack.c.l.b16 %v1209
    %v1697 = vunpack.c.l.b16 %v1210
    %v1698 = vunpack.c.l.b16 %v1211
    %v1699 = vunpack.c.l.b16 %v1212
    %v1700 = vunpack.c.l.b16 %v1213
    %v1701 = vunpack.c.l.b16 %v1214
    %v1702 = vunpack.c.l.b16 %v1215
    %v1703 = vunpack.c.l.b16 %v1216
    %v1704 = vunpack.c.l.b16 %v1217
    %v1705 = vunpack.c.l.b16 %v1218
    %v1706 = vunpack.c.l.b16 %v1219
    %v1707 = vunpack.c.l.b16 %v1220
    %v1708 = vunpack.c.l.b16 %v1221
    %v1709 = vunpack.c.l.b16 %v1222
    %v1710 = vunpack.c.l.b16 %v1223
    %v1711 = vunpack.c.l.b16 %v1224
    %v1712 = vunpack.c.l.b16 %v1225
    %v1713 = vunpack.c.l.b16 %v1226
    %v1714 = vunpack.c.l.b16 %v1227
    %v1715 = vunpack.c.l.b16 %v1228
    %v1716 = vunpack.c.l.b16 %v1229
    %v1717 = vunpack.c.l.b16 %v1230
    %v1718 = vunpack.c.l.b16 %v1231
    %v1719 = vunpack.c.l.b16 %v1232
    %v1720 = vunpack.c.l.b16 %v1233
    %v1721 = vunpack.c.l.b16 %v1234
    %v1722 = vunpack.c.l.b16 %v1235
    %v1723 = vunpack.c.l.b16 %v1236
    %v1724 = vunpack.c.l.b16 %v1237
    %v1725 = vunpack.c.l.b16 %v1238
    %v1726 = vunpack.c.l.b16 %v1239
    %v1727 = vunpack.c.l.b16 %v1240
    %v1728 = vunpack.c.l.b16 %v1241
    %v1729 = vunpack.c.l.b16 %v1242
    %v1730 = vunpack.c.l.b16 %v1243
    %v1731 = vunpack.c.l.b16 %v1244
    %v1732 = vunpack.c.l.b16 %v1245
    %v1733 = vunpack.c.l.b16 %v1246
    %v1734 = vunpack.c.l.b16 %v1247
    %v1735 = vunpack.c.l.b16 %v1248
    %v1736 = vunpack.c.l.b16 %v1249
    %v1737 = vunpack.c.l.b16 %v1250
    %v1738 = vunpack.c.l.b16 %v1251
    %v1739 = vunpack.c.l.b16 %v1252
    %v1740 = vunpack.c.l.b16 %v1253
    %v1741 = vunpack.c.l.b16 %v1254
    %v1742 = vunpack.c.l.b16 %v1255
    %v1743 = vunpack.c.l.b16 %v1256
    %v1744 = vunpack.c.l.b16 %v1257
    %v1745 = vunpack.c.l.b16 %v1258
    %v1746 = vunpack.c.l.b16 %v1259
    %v1747 = vunpack.c.l.b16 %v1260
    %v1748 = vunpack.c.l.b16 %v1261
    %v1749 = vunpack.c.l.b16 %v1262
    %v1750 = vunpack.c.l.b16 %v1263
    %v1751 = vunpack.c.l.b16 %v1264
    %v1752 = vpack.c.b16 %v1513, %v1512
    %v1753 = vpack.c.b16 %v1515, %v1514
    %v1754 = vpack.c.b16 %v1517, %v1516
    %v1755 = vpack.c.b16 %v1519, %v1518
    %v1756 = vpack.c.b16 %v1521, %v1520
    %v1757 = vpack.c.b16 %v1523, %v1522
    %v1758 = vpack.c.b16 %v1525, %v1524
    %v1759 = vpack.c.b16 %v1527, %v1526
    %v1760 = vpack.c.b16 %v1529, %v1528
    %v1761 = vpack.c.b16 %v1531, %v1530
    %v1762 = vpack.c.b16 %v1533, %v1532
    %v1763 = vpack.c.b16 %v1535, %v1534
    %v1764 = vpack.c.b16 %v1537, %v1536
    %v1765 = vpack.c.b16 %v1539, %v1538
    %v1766 = vpack.c.b16 %v1541, %v1540
    %v1767 = vpack.c.b16 %v1543, %v1542
    %v1768 = vpack.c.b16 %v1545, %v1544
    %v1769 = vpack.c.b16 %v1547, %v1546
    %v1770 = vpack.c.b16 %v1549, %v1548
    %v1771 = vpack.c.b16 %v1551, %v1550
    %v1772 = vpack.c.b16 %v1553, %v1552
    %v1773 = vpack.c.b16 %v1555, %v1554
    %v1774 = vpack.c.b16 %v1557, %v1556
    %v1775 = vpack.c.b16 %v1559, %v1558
    %v1776 = vpack.c.b16 %v1561, %v1560
    %v1777 = vpack.c.b16 %v1563, %v1562
    %v1778 = vpack.c.b16 %v1565, %v1564
    %v1779 = vpack.c.b16 %v1567, %v1566
    %v1780 = vpack.c.b16 %v1569, %v1568
    %v1781 = vpack.c.b16 %v1571, %v1570
    %v1782 = vpack.c.b16 %v1573, %v1572
    %v1783 = vpack.c.b16 %v1575, %v1574
    %v1784 = vpack.c.b16 %v1577, %v1576
    %v1785 = vpack.c.b16 %v1579, %v1578
    %v1786 = vpack.c.b16 %v1581, %v1580
    %v1787 = vpack.c.b16 %v1583, %v1582
    %v1788 = vpack.c.b16 %v1585, %v1584
    %v1789 = vpack.c.b16 %v1587, %v1586
    %v1790 = vpack.c.b16 %v1589, %v1588
    %v1791 = vpack.c.b16 %v1591, %v1590
    %v1792 = vpack.c.b16 %v1593, %v1592
    %v1793 = vpack.c.b16 %v1595, %v1594
    %v1794 = vpack.c.b16 %v1597, %v1596
    %v1795 = vpack.c.b16 %v1599, %v1598
    %v1796 = vpack.c.b16 %v1601, %v1600
    %v1797 = vpack.c.b16 %v1603, %v1602
    %v1798 = vpack.c.b16 %v1605, %v1604
    %v1799 = vpack.c.b16 %v1607, %v1606
    %v1800 = vpack.c.b16 %v1609, %v1608
    %v1801 = vpack.c.b16 %v1611, %v1610
    %v1802 = vpack.c.b16 %v1613, %v1612
    %v1803 = vpack.c.b16 %v1615, %v1614
    %v1804 = vpack.c.b16 %v1617, %v1616
    %v1805 = vpack.c.b16 %v1619, %v1618
    %v1806 = vpack.c.b16 %v1621, %v1620
    %v1807 = vpack.c.b16 %v1623, %v1622
    %v1808 = vpack.c.b16 %v1625, %v1624
    %v1809 = vpack.c.b16 %v1627, %v1626
    %v1810 = vpack.c.b16 %v1629, %v1628
    %v1811 = vpack.c.b16 %v1631, %v1630
    %v1812 = vpack.c.b16 %v1633, %v1632
    %v1813 = vpack.c.b16 %v1635, %v1634
    %v1814 = vpack.c.b16 %v1637, %v1636
    %v1815 = vpack.c.b16 %v1639, %v1638
    %v1816 = vpack.c.b16 %v1641, %v1640
    %v1817 = vpack.c.b16 %v1643, %v1642
    %v1818 = vpack.c.b16 %v1645, %v1644
    %v1819 = vpack.c.b16 %v1647, %v1646
    %v1820 = vpack.c.b16 %v1649, %v1648
    %v1821 = vpack.c.b16 %v1651, %v1650
    %v1822 = vpack.c.b16 %v1653, %v1652
    %v1823 = vpack.c.b16 %v1655, %v1654
    %v1824 = vpack.c.b16 %v1657, %v1656
    %v1825 = vpack.c.b16 %v1659, %v1658
    %v1826 = vpack.c.b16 %v1661, %v1660
    %v1827 = vpack.c.b16 %v1663, %v1662
    %v1828 = vpack.c.b16 %v1665, %v1664
    %v1829 = vpack.c.b16 %v1667, %v1666
    %v1830 = vpack.c.b16 %v1669, %v1668
    %v1831 = vpack.c.b16 %v1671, %v1670
    %v1832 = vpack.c.b16 %v1673, %v1672
    %v1833 = vpack.c.b16 %v1675, %v1674
    %v1834 = vpack.c.b16 %v1677, %v1676
    %v1835 = vpack.c.b16 %v1679, %v1678
    %v1836 = vpack.c.b16 %v1681, %v1680
    %v1837 = vpack.c.b16 %v1683, %v1682
    %v1838 = vpack.c.b16 %v1685, %v1684
    %v1839 = vpack.c.b16 %v1687, %v1686
    %v1840 = vpack.c.b16 %v1689, %v1688
    %v1841 = vpack.c.b16 %v1691, %v1690
    %v1842 = vpack.c.b16 %v1693, %v1692
    %v1843 = vpack.c.b16 %v1695, %v1694
    %v1844 = vpack.c.b16 %v1697, %v1696
    %v1845 = vpack.c.b16 %v1699, %v1698
    %v1846 = vpack.c.b16 %v1701, %v1700
    %v1847 = vpack.c.b16 %v1703, %v1702
    %v1848 = vpack.c.b16 %v1705, %v1704
    %v1849 = vpack.c.b16 %v1707, %v1706
    %v1850 = vpack.c.b16 %v1709, %v1708
    %v1851 = vpack.c.b16 %v1711, %v1710
    %v1852 = vpack.c.b16 %v1713, %v1712
    %v1853 = vpack.c.b16 %v1715, %v1714
    %v1854 = vpack.c.b16 %v1717, %v1716
    %v1855 = vpack.c.b16 %v1719, %v1718
    %v1856 = vpack.c.b16 %v1721, %v1720
    %v1857 = vpack.c.b16 %v1723, %v1722
    %v1858 = vpack.c.b16 %v1725, %v1724
    %v1859 = vpack.c.b16 %v1727, %v1726
    %v1860 = vpack.c.b16 %v1729, %v1728
    %v1861 = vpack.c.b16 %v1731, %v1730
    %v1862 = vpack.c.b16 %v1733, %v1732
    %v1863 = vpack.c.b16 %v1735, %v1734
    %v1864 = vpack.c.b16 %v1737, %v1736
    %v1865 = vpack.c.b16 %v1739, %v1738
    %v1866 = vpack.c.b16 %v1741, %v1740
    %v1867 = vpack.c.b16 %v1743, %v1742
    %v1868 = vpack.c.b16 %v1745, %v1744
    %v1869 = vpack.c.b16 %v1747, %v1746
    %v1870 = vpack.c.b16 %v1749, %v1748
    %v1871 = vpack.c.b16 %v1751, %v1750
    %1992 = vmatprep.subr.bf16.mxu0 0
    %1993 = vmatpush1.bf16.msra.mxu0 %v1752
    %1994 = vmatprep.subr.bf16.mxu0 0
    %1995 = vmatpush1.bf16.msra.mxu0 %v1753
    %1996 = vmatprep.subr.bf16.mxu0 0
    %1997 = vmatpush1.bf16.msra.mxu0 %v1754
    %1998 = vmatprep.subr.bf16.mxu0 0
    %1999 = vmatpush1.bf16.msra.mxu0 %v1755
    %2000 = vmatprep.subr.bf16.mxu0 0
    %2001 = vmatpush1.bf16.msra.mxu0 %v1756
    %2002 = vmatprep.subr.bf16.mxu0 0
    %2003 = vmatpush1.bf16.msra.mxu0 %v1757
    %2004 = vmatprep.subr.bf16.mxu0 0
    %2005 = vmatpush1.bf16.msra.mxu0 %v1758
    %2006 = vmatprep.subr.bf16.mxu0 0
    %2007 = vmatpush1.bf16.msra.mxu0 %v1759
    %2008 = vmatprep.subr.bf16.mxu0 0
    %2009 = vmatpush1.bf16.msra.mxu0 %v1760
    %2010 = vmatprep.subr.bf16.mxu0 0
    %2011 = vmatpush1.bf16.msra.mxu0 %v1761
    %2012 = vmatprep.subr.bf16.mxu0 0
    %2013 = vmatpush1.bf16.msra.mxu0 %v1762
    %2014 = vmatprep.subr.bf16.mxu0 0
    %2015 = vmatpush1.bf16.msra.mxu0 %v1763
    %2016 = vmatprep.subr.bf16.mxu0 0
    %2017 = vmatpush1.bf16.msra.mxu0 %v1764
    %2018 = vmatprep.subr.bf16.mxu0 0
    %2019 = vmatpush1.bf16.msra.mxu0 %v1765
    %2020 = vmatprep.subr.bf16.mxu0 0
    %2021 = vmatpush1.bf16.msra.mxu0 %v1766
    %2022 = vmatprep.subr.bf16.mxu0 0
    %2023 = vmatpush1.bf16.msra.mxu0 %v1767
    %2024 = vmatprep.mubr.bf16.mxu0 %v1011
    %2025 = vmatmul.mubr.bf16.gmra.mrb[0].mxu0 %v1010
    %v2026 = vpop.f32.mrb[0].mxu0
    %v2027 = vadd.f32 %v1270, %v2026
    %v2028 = vpop.f32.mrb[0].mxu0
    %v2029 = vpop.f32.mrb[0].mxu0
    %v2030 = vpop.f32.mrb[0].mxu0
    %2031 = vdwg.mxu0
    %2032 = vmatprep.subr.bf16.mxu0 0
    %2033 = vmatpush1.bf16.msra.mxu0 %v1768
    %2034 = vmatprep.subr.bf16.mxu0 0
    %2035 = vmatpush1.bf16.msra.mxu0 %v1769
    %2036 = vmatprep.subr.bf16.mxu0 0
    %2037 = vmatpush1.bf16.msra.mxu0 %v1770
    %2038 = vmatprep.subr.bf16.mxu0 0
    %2039 = vmatpush1.bf16.msra.mxu0 %v1771
    %2040 = vmatprep.subr.bf16.mxu0 0
    %2041 = vmatpush1.bf16.msra.mxu0 %v1772
    %2042 = vmatprep.subr.bf16.mxu0 0
    %2043 = vmatpush1.bf16.msra.mxu0 %v1773
    %2044 = vmatprep.subr.bf16.mxu0 0
    %2045 = vmatpush1.bf16.msra.mxu0 %v1774
    %2046 = vmatprep.subr.bf16.mxu0 0
    %2047 = vmatpush1.bf16.msra.mxu0 %v1775
    %2048 = vmatprep.subr.bf16.mxu0 0
    %2049 = vmatpush1.bf16.msra.mxu0 %v1776
    %2050 = vmatprep.subr.bf16.mxu0 0
    %2051 = vmatpush1.bf16.msra.mxu0 %v1777
    %2052 = vmatprep.subr.bf16.mxu0 0
    %2053 = vmatpush1.bf16.msra.mxu0 %v1778
    %2054 = vmatprep.subr.bf16.mxu0 0
    %2055 = vmatpush1.bf16.msra.mxu0 %v1779
    %2056 = vmatprep.subr.bf16.mxu0 0
    %2057 = vmatpush1.bf16.msra.mxu0 %v1780
    %2058 = vmatprep.subr.bf16.mxu0 0
    %2059 = vmatpush1.bf16.msra.mxu0 %v1781
    %2060 = vmatprep.subr.bf16.mxu0 0
    %2061 = vmatpush1.bf16.msra.mxu0 %v1782
    %2062 = vmatprep.subr.bf16.mxu0 0
    %2063 = vmatpush1.bf16.msra.mxu0 %v1783
    %2064 = vmatprep.mubr.bf16.mxu0 %v1013
    %2065 = vmatmul.mubr.bf16.gmra.mrb[0].mxu0 %v1012
    %v2066 = vpop.f32.mrb[0].mxu0
    %v2067 = vadd.f32 %v2027, %v2066
    %v2068 = vpop.f32.mrb[0].mxu0
    %v2069 = vpop.f32.mrb[0].mxu0
    %v2070 = vpop.f32.mrb[0].mxu0
    %2071 = vdwg.mxu0
    %2072 = vmatprep.subr.bf16.mxu0 0
    %2073 = vmatpush1.bf16.msra.mxu0 %v1784
    %2074 = vmatprep.subr.bf16.mxu0 0
    %2075 = vmatpush1.bf16.msra.mxu0 %v1785
    %2076 = vmatprep.subr.bf16.mxu0 0
    %2077 = vmatpush1.bf16.msra.mxu0 %v1786
    %2078 = vmatprep.subr.bf16.mxu0 0
    %2079 = vmatpush1.bf16.msra.mxu0 %v1787
    %2080 = vmatprep.subr.bf16.mxu0 0
    %2081 = vmatpush1.bf16.msra.mxu0 %v1788
    %2082 = vmatprep.subr.bf16.mxu0 0
    %2083 = vmatpush1.bf16.msra.mxu0 %v1789
    %2084 = vmatprep.subr.bf16.mxu0 0
    %2085 = vmatpush1.bf16.msra.mxu0 %v1790
    %2086 = vmatprep.subr.bf16.mxu0 0
    %2087 = vmatpush1.bf16.msra.mxu0 %v1791
    %2088 = vmatprep.subr.bf16.mxu0 0
    %2089 = vmatpush1.bf16.msra.mxu0 %v1792
    %2090 = vmatprep.subr.bf16.mxu0 0
    %2091 = vmatpush1.bf16.msra.mxu0 %v1793
    %2092 = vmatprep.subr.bf16.mxu0 0
    %2093 = vmatpush1.bf16.msra.mxu0 %v1794
    %2094 = vmatprep.subr.bf16.mxu0 0
    %2095 = vmatpush1.bf16.msra.mxu0 %v1795
    %2096 = vmatprep.subr.bf16.mxu0 0
    %2097 = vmatpush1.bf16.msra.mxu0 %v1796
    %2098 = vmatprep.subr.bf16.mxu0 0
    %2099 = vmatpush1.bf16.msra.mxu0 %v1797
    %2100 = vmatprep.subr.bf16.mxu0 0
    %2101 = vmatpush1.bf16.msra.mxu0 %v1798
    %2102 = vmatprep.subr.bf16.mxu0 0
    %2103 = vmatpush1.bf16.msra.mxu0 %v1799
    %2104 = vmatprep.mubr.bf16.mxu0 %v1015
    %2105 = vmatmul.mubr.bf16.gmra.mrb[0].mxu0 %v1014
    %v2106 = vpop.f32.mrb[0].mxu0
    %v2107 = vadd.f32 %v2067, %v2106
    %v2108 = vpop.f32.mrb[0].mxu0
    %v2109 = vpop.f32.mrb[0].mxu0
    %v2110 = vpop.f32.mrb[0].mxu0
    %2111 = vdwg.mxu0
    %2112 = vmatprep.subr.bf16.mxu0 0
    %2113 = vmatpush1.bf16.msra.mxu0 %v1800
    %2114 = vmatprep.subr.bf16.mxu0 0
    %2115 = vmatpush1.bf16.msra.mxu0 %v1801
    %2116 = vmatprep.subr.bf16.mxu0 0
    %2117 = vmatpush1.bf16.msra.mxu0 %v1802
    %2118 = vmatprep.subr.bf16.mxu0 0
    %2119 = vmatpush1.bf16.msra.mxu0 %v1803
    %2120 = vmatprep.subr.bf16.mxu0 0
    %2121 = vmatpush1.bf16.msra.mxu0 %v1804
    %2122 = vmatprep.subr.bf16.mxu0 0
    %2123 = vmatpush1.bf16.msra.mxu0 %v1805
    %2124 = vmatprep.subr.bf16.mxu0 0
    %2125 = vmatpush1.bf16.msra.mxu0 %v1806
    %2126 = vmatprep.subr.bf16.mxu0 0
    %2127 = vmatpush1.bf16.msra.mxu0 %v1807
    %2128 = vmatprep.subr.bf16.mxu0 0
    %2129 = vmatpush1.bf16.msra.mxu0 %v1808
    %2130 = vmatprep.subr.bf16.mxu0 0
    %2131 = vmatpush1.bf16.msra.mxu0 %v1809
    %2132 = vmatprep.subr.bf16.mxu0 0
    %2133 = vmatpush1.bf16.msra.mxu0 %v1810
    %2134 = vmatprep.subr.bf16.mxu0 0
    %2135 = vmatpush1.bf16.msra.mxu0 %v1811
    %2136 = vmatprep.subr.bf16.mxu0 0
    %2137 = vmatpush1.bf16.msra.mxu0 %v1812
    %2138 = vmatprep.subr.bf16.mxu0 0
    %2139 = vmatpush1.bf16.msra.mxu0 %v1813
    %2140 = vmatprep.subr.bf16.mxu0 0
    %2141 = vmatpush1.bf16.msra.mxu0 %v1814
    %2142 = vmatprep.subr.bf16.mxu0 0
    %2143 = vmatpush1.bf16.msra.mxu0 %v1815
    %2144 = vmatprep.mubr.bf16.mxu0 %v1017
    %2145 = vmatmul.mubr.bf16.gmra.mrb[0].mxu0 %v1016
    %v2146 = vpop.f32.mrb[0].mxu0
    %v2147 = vadd.f32 %v2107, %v2146
    %v2148 = vpop.f32.mrb[0].mxu0
    %v2149 = vpop.f32.mrb[0].mxu0
    %v2150 = vpop.f32.mrb[0].mxu0
    %2151 = vdwg.mxu0
    %2152 = vmatprep.subr.bf16.mxu0 0
    %2153 = vmatpush1.bf16.msra.mxu0 %v1816
    %2154 = vmatprep.subr.bf16.mxu0 0
    %2155 = vmatpush1.bf16.msra.mxu0 %v1817
    %2156 = vmatprep.subr.bf16.mxu0 0
    %2157 = vmatpush1.bf16.msra.mxu0 %v1818
    %2158 = vmatprep.subr.bf16.mxu0 0
    %2159 = vmatpush1.bf16.msra.mxu0 %v1819
    %2160 = vmatprep.subr.bf16.mxu0 0
    %2161 = vmatpush1.bf16.msra.mxu0 %v1820
    %2162 = vmatprep.subr.bf16.mxu0 0
    %2163 = vmatpush1.bf16.msra.mxu0 %v1821
    %2164 = vmatprep.subr.bf16.mxu0 0
    %2165 = vmatpush1.bf16.msra.mxu0 %v1822
    %2166 = vmatprep.subr.bf16.mxu0 0
    %2167 = vmatpush1.bf16.msra.mxu0 %v1823
    %2168 = vmatprep.subr.bf16.mxu0 0
    %2169 = vmatpush1.bf16.msra.mxu0 %v1824
    %2170 = vmatprep.subr.bf16.mxu0 0
    %2171 = vmatpush1.bf16.msra.mxu0 %v1825
    %2172 = vmatprep.subr.bf16.mxu0 0
    %2173 = vmatpush1.bf16.msra.mxu0 %v1826
    %2174 = vmatprep.subr.bf16.mxu0 0
    %2175 = vmatpush1.bf16.msra.mxu0 %v1827
    %2176 = vmatprep.subr.bf16.mxu0 0
    %2177 = vmatpush1.bf16.msra.mxu0 %v1828
    %2178 = vmatprep.subr.bf16.mxu0 0
    %2179 = vmatpush1.bf16.msra.mxu0 %v1829
    %2180 = vmatprep.subr.bf16.mxu0 0
    %2181 = vmatpush1.bf16.msra.mxu0 %v1830
    %2182 = vmatprep.subr.bf16.mxu0 0
    %2183 = vmatpush1.bf16.msra.mxu0 %v1831
    %2184 = vmatprep.mubr.bf16.mxu0 %v1019
    %2185 = vmatmul.mubr.bf16.gmra.mrb[0].mxu0 %v1018
    %v2186 = vpop.f32.mrb[0].mxu0
    %v2187 = vadd.f32 %v2147, %v2186
    %v2188 = vpop.f32.mrb[0].mxu0
    %v2189 = vpop.f32.mrb[0].mxu0
    %v2190 = vpop.f32.mrb[0].mxu0
    %2191 = vdwg.mxu0
    %2192 = vmatprep.subr.bf16.mxu0 0
    %2193 = vmatpush1.bf16.msra.mxu0 %v1832
    %2194 = vmatprep.subr.bf16.mxu0 0
    %2195 = vmatpush1.bf16.msra.mxu0 %v1833
    %2196 = vmatprep.subr.bf16.mxu0 0
    %2197 = vmatpush1.bf16.msra.mxu0 %v1834
    %2198 = vmatprep.subr.bf16.mxu0 0
    %2199 = vmatpush1.bf16.msra.mxu0 %v1835
    %2200 = vmatprep.subr.bf16.mxu0 0
    %2201 = vmatpush1.bf16.msra.mxu0 %v1836
    %2202 = vmatprep.subr.bf16.mxu0 0
    %2203 = vmatpush1.bf16.msra.mxu0 %v1837
    %2204 = vmatprep.subr.bf16.mxu0 0
    %2205 = vmatpush1.bf16.msra.mxu0 %v1838
    %2206 = vmatprep.subr.bf16.mxu0 0
    %2207 = vmatpush1.bf16.msra.mxu0 %v1839
    %2208 = vmatprep.subr.bf16.mxu0 0
    %2209 = vmatpush1.bf16.msra.mxu0 %v1840
    %2210 = vmatprep.subr.bf16.mxu0 0
    %2211 = vmatpush1.bf16.msra.mxu0 %v1841
    %2212 = vmatprep.subr.bf16.mxu0 0
    %2213 = vmatpush1.bf16.msra.mxu0 %v1842
    %2214 = vmatprep.subr.bf16.mxu0 0
    %2215 = vmatpush1.bf16.msra.mxu0 %v1843
    %2216 = vmatprep.subr.bf16.mxu0 0
    %2217 = vmatpush1.bf16.msra.mxu0 %v1844
    %2218 = vmatprep.subr.bf16.mxu0 0
    %2219 = vmatpush1.bf16.msra.mxu0 %v1845
    %2220 = vmatprep.subr.bf16.mxu0 0
    %2221 = vmatpush1.bf16.msra.mxu0 %v1846
    %2222 = vmatprep.subr.bf16.mxu0 0
    %2223 = vmatpush1.bf16.msra.mxu0 %v1847
    %2224 = vmatprep.mubr.bf16.mxu0 %v1021
    %2225 = vmatmul.mubr.bf16.gmra.mrb[0].mxu0 %v1020
    %v2226 = vpop.f32.mrb[0].mxu0
    %v2227 = vadd.f32 %v2187, %v2226
    %v2228 = vpop.f32.mrb[0].mxu0
    %v2229 = vpop.f32.mrb[0].mxu0
    %v2230 = vpop.f32.mrb[0].mxu0
    %2231 = vdwg.mxu0
    %2232 = vmatprep.subr.bf16.mxu0 0
    %2233 = vmatpush1.bf16.msra.mxu0 %v1848
    %2234 = vmatprep.subr.bf16.mxu0 0
    %2235 = vmatpush1.bf16.msra.mxu0 %v1849
    %2236 = vmatprep.subr.bf16.mxu0 0
    %2237 = vmatpush1.bf16.msra.mxu0 %v1850
    %2238 = vmatprep.subr.bf16.mxu0 0
    %2239 = vmatpush1.bf16.msra.mxu0 %v1851
    %2240 = vmatprep.subr.bf16.mxu0 0
    %2241 = vmatpush1.bf16.msra.mxu0 %v1852
    %2242 = vmatprep.subr.bf16.mxu0 0
    %2243 = vmatpush1.bf16.msra.mxu0 %v1853
    %2244 = vmatprep.subr.bf16.mxu0 0
    %2245 = vmatpush1.bf16.msra.mxu0 %v1854
    %2246 = vmatprep.subr.bf16.mxu0 0
    %2247 = vmatpush1.bf16.msra.mxu0 %v1855
    %2248 = vmatprep.subr.bf16.mxu0 0
    %2249 = vmatpush1.bf16.msra.mxu0 %v1856
    %2250 = vmatprep.subr.bf16.mxu0 0
    %2251 = vmatpush1.bf16.msra.mxu0 %v1857
    %2252 = vmatprep.subr.bf16.mxu0 0
    %2253 = vmatpush1.bf16.msra.mxu0 %v1858
    %2254 = vmatprep.subr.bf16.mxu0 0
    %2255 = vmatpush1.bf16.msra.mxu0 %v1859
    %2256 = vmatprep.subr.bf16.mxu0 0
    %2257 = vmatpush1.bf16.msra.mxu0 %v1860
    %2258 = vmatprep.subr.bf16.mxu0 0
    %2259 = vmatpush1.bf16.msra.mxu0 %v1861
    %2260 = vmatprep.subr.bf16.mxu0 0
    %2261 = vmatpush1.bf16.msra.mxu0 %v1862
    %2262 = vmatprep.subr.bf16.mxu0 0
    %2263 = vmatpush1.bf16.msra.mxu0 %v1863
    %2264 = vmatprep.mubr.bf16.mxu0 %v1023
    %2265 = vmatmul.mubr.bf16.gmra.mrb[0].mxu0 %v1022
    %v2266 = vpop.f32.mrb[0].mxu0
    %v2267 = vadd.f32 %v2227, %v2266
    %v2268 = vpop.f32.mrb[0].mxu0
    %v2269 = vpop.f32.mrb[0].mxu0
    %v2270 = vpop.f32.mrb[0].mxu0
    %2271 = vdwg.mxu0
    %2272 = vmatprep.subr.bf16.mxu0 0
    %2273 = vmatpush1.bf16.msra.mxu0 %v1864
    %2274 = vmatprep.subr.bf16.mxu0 0
    %2275 = vmatpush1.bf16.msra.mxu0 %v1865
    %2276 = vmatprep.subr.bf16.mxu0 0
    %2277 = vmatpush1.bf16.msra.mxu0 %v1866
    %2278 = vmatprep.subr.bf16.mxu0 0
    %2279 = vmatpush1.bf16.msra.mxu0 %v1867
    %2280 = vmatprep.subr.bf16.mxu0 0
    %2281 = vmatpush1.bf16.msra.mxu0 %v1868
    %2282 = vmatprep.subr.bf16.mxu0 0
    %2283 = vmatpush1.bf16.msra.mxu0 %v1869
    %2284 = vmatprep.subr.bf16.mxu0 0
    %2285 = vmatpush1.bf16.msra.mxu0 %v1870
    %2286 = vmatprep.subr.bf16.mxu0 0
    %2287 = vmatpush1.bf16.msra.mxu0 %v1871
    %2288 = vmatprep.subr.bf16.mxu0 0
    %2289 = vmatpush1.bf16.msra.mxu0 0
    %2290 = vmatprep.subr.bf16.mxu0 0
    %2291 = vmatpush1.bf16.msra.mxu0 0
    %2292 = vmatprep.subr.bf16.mxu0 0
    %2293 = vmatpush1.bf16.msra.mxu0 0
    %2294 = vmatprep.subr.bf16.mxu0 0
    %2295 = vmatpush1.bf16.msra.mxu0 0
    %2296 = vmatprep.subr.bf16.mxu0 0
    %2297 = vmatpush1.bf16.msra.mxu0 0
    %2298 = vmatprep.subr.bf16.mxu0 0
    %2299 = vmatpush1.bf16.msra.mxu0 0
    %2300 = vmatprep.subr.bf16.mxu0 0
    %2301 = vmatpush1.bf16.msra.mxu0 0
    %2302 = vmatprep.subr.bf16.mxu0 0
    %2303 = vmatpush1.bf16.msra.mxu0 0
    %2304 = vmatprep.mubr.bf16.mxu0 0
    %2305 = vmatmul.mubr.bf16.gmra.mrb[0].mxu0 %v1024
    %v2306 = vpop.f32.mrb[0].mxu0
    %v2307 = vadd.f32 %v2267, %v2306
    %v2308 = vpop.f32.mrb[0].mxu0
    %v2309 = vpop.f32.mrb[0].mxu0
    %v2310 = vpop.f32.mrb[0].mxu0
    %2311 = vdwg.mxu0
    %v2312 = vmax.f32 %v2307, 0.0
    %v2313 = vpack.c.bf16 %v2312, %v2312
    %v2314 = vld [vmem:[%s6] sm:$0xf]
    %v2315 = vld [vmem:[%s6 + $0x4] sm:$0xf]
    %v2316 = vld [vmem:[%s6 + $0x8] sm:$0xf]
    %v2317 = vld [vmem:[%s6 + $0xc] sm:$0xf]
    %v2318 = vld [vmem:[%s7] sm:$0x1]
    %v2320 = vlaneseq
    %v2321 = vshrl.u32 %v2320, 7
    %v2322 = vsub.s32 0, %v2321
    %v2323 = vrot.slane %v2318, %v2322
    %v2329 = vunpack.c.l.b16 %v2314
    %v2330 = vunpack.c.l.b16 %v2315
    %v2331 = vunpack.c.l.b16 %v2316
    %v2332 = vunpack.c.l.b16 %v2317
    %v2333 = vpack.c.b16 %v2330, %v2329
    %v2334 = vpack.c.b16 %v2332, %v2331
    %vm2337 = vcmask 261120
    %v2339 = vsel %vm2337, %v2313, 0
    %2341 = vmatprep.subr.bf16.mxu0 0
    %2342 = vmatpush1.bf16.msra.mxu0 %v2333
    %2343 = vmatprep.subr.bf16.mxu0 0
    %2344 = vmatpush1.bf16.msra.mxu0 %v2334
    %2345 = vmatprep.subr.bf16.mxu0 0
    %2346 = vmatpush1.bf16.msra.mxu0 0
    %2347 = vmatprep.subr.bf16.mxu0 0
    %2348 = vmatpush1.bf16.msra.mxu0 0
    %2349 = vmatprep.subr.bf16.mxu0 0
    %2350 = vmatpush1.bf16.msra.mxu0 0
    %2351 = vmatprep.subr.bf16.mxu0 0
    %2352 = vmatpush1.bf16.msra.mxu0 0
    %2353 = vmatprep.subr.bf16.mxu0 0
    %2354 = vmatpush1.bf16.msra.mxu0 0
    %2355 = vmatprep.subr.bf16.mxu0 0
    %2356 = vmatpush1.bf16.msra.mxu0 0
    %2357 = vmatprep.subr.bf16.mxu0 0
    %2358 = vmatpush1.bf16.msra.mxu0 0
    %2359 = vmatprep.subr.bf16.mxu0 0
    %2360 = vmatpush1.bf16.msra.mxu0 0
    %2361 = vmatprep.subr.bf16.mxu0 0
    %2362 = vmatpush1.bf16.msra.mxu0 0
    %2363 = vmatprep.subr.bf16.mxu0 0
    %2364 = vmatpush1.bf16.msra.mxu0 0
    %2365 = vmatprep.subr.bf16.mxu0 0
    %2366 = vmatpush1.bf16.msra.mxu0 0
    %2367 = vmatprep.subr.bf16.mxu0 0
    %2368 = vmatpush1.bf16.msra.mxu0 0
    %2369 = vmatprep.subr.bf16.mxu0 0
    %2370 = vmatpush1.bf16.msra.mxu0 0
    %2371 = vmatprep.subr.bf16.mxu0 0
    %2372 = vmatpush1.bf16.msra.mxu0 0
    %2373 = vmatprep.mubr.bf16.mxu0 0
    %2374 = vmatmul.mubr.bf16.gmra.mrb[0].mxu0 %v2339
    %v2375 = vpop.f32.mrb[0].mxu0
    %v2376 = vadd.f32 %v2323, %v2375
    %v2377 = vpop.f32.mrb[0].mxu0
    %v2378 = vpop.f32.mrb[0].mxu0
    %v2379 = vpop.f32.mrb[0].mxu0
    %2380 = vdwg.mxu0
    %v2381 = vsub.f32 0.0, %v2376
    %v2382 = vmul.f32 %v2381, 1.442695
    %v2383 = vpow.pop %v2382
    %v2384 = vadd.f32 %v2383, 1.0
    %v2385 = vrcp.pop %v2384
    %v2386 = vmul.f32 1.0, %v2385
    %v2387 = vld [vmem:[%s1] sm:$0xff]
    %v2388 = vadd.f32 %v2386, %v2387
    %2389 = vmax.xlane.f32.xlu0 %v2388
    %v2390 = vpop.xlane.xlu0 %2389
    %v2391 = vsub.f32 %v2388, %v2390
    %v2392 = vmul.f32 %v2391, 1.442695
    %v2393 = vpow.pop %v2392
    %2394 = vadd.xlane.f32.xlu0 %v2393
    %v2395 = vpop.xlane.xlu0 %2394
    %v2396 = vrcp.pop %v2395
    %v2397 = vmul.f32 %v2393, %v2396
    %2398 = vst [vmem:[#allocation2] sm:$0xff] %v2397
    // Predicated region
    $region34: #{tpu_custom_call.1} parent=1 // pred_check
      _
    $region35: #{tpu_custom_call.1} parent=1 // pred_check_branch
      %2400 = sbr.rel (0) target = $region37
    $region36: #{tpu_custom_call.1} parent=1 // pred_region
      %s2402 = ssub.s32 128, 128
      %2403 = vsyncadd [#allocation3], %s2402
      %s2405 = sshll.u32 [#allocation2], 4
      %s2406 = int_to_ptr.vmem [resolvable:$true] %s2405
      %2408 = dma.vmem_to_hbm [thread:$0]  %s2406, 128, %s8, [#allocation3]
    $region37: #{tpu_custom_call.1} parent=1 // pred_fallthru
      _
    // Predicated region
    $region38: #{tpu_custom_call.1} parent=1 // pred_check
      _
    $region39: #{tpu_custom_call.1} parent=1 // pred_check_branch
      %2410 = sbr.rel (0) target = $region41
    $region40: #{tpu_custom_call.1} parent=1 // pred_region
      %2411 = dma.done [#allocation3], 128
    $region41: #{tpu_custom_call.1} parent=1 // pred_fallthru
      _
    %2412 = vsyncpa [#allocation3], 1

</llo_original>
